<compile_context>
chip_gen: v7x
topology: tpu7x:2x2x1
jax: 0.10.0
libtpu: 0.0.40
codegen_flags: <defaults>
</compile_context>

<pallas_src>
import numpy as np
import jax
import jax.numpy as jnp
from jax.experimental import pallas as pl
from jax.experimental.pallas import tpu as pltpu


# --------------------------------------------------------------------------
# One-time weight preparation (host side, runs once -- NOT per forward call).
# --------------------------------------------------------------------------

def _scatter_table(h_in, k, stride, padding, h_out):
    """T[h, ky, oh] = 1 where oh == h*stride - padding + ky (ConvTranspose2d)."""
    t = np.zeros((h_in, k, h_out), np.float32)
    for h in range(h_in):
        for ky in range(k):
            oh = h * stride - padding + ky
            if 0 <= oh < h_out:
                t[h, ky, oh] = 1.0
    return t


def init_generator_params(key, *, x_dim, image_channel, latent_dim, g_hidden):
    """Deterministic synthetic parameters matching the PyTorch __init__ shapes."""
    poweroftwo = int(x_dim // 4)
    n_layers = int(np.log2(poweroftwo))
    cfgs = [dict(cin=latent_dim, cout=g_hidden * poweroftwo, k=4, s=1, p=0, act="bn_relu")]
    for _ in range(n_layers):
        cfgs.append(dict(cin=g_hidden * poweroftwo, cout=g_hidden * (poweroftwo // 2),
                         k=4, s=2, p=1, act="bn_relu"))
        poweroftwo //= 2
    cfgs.append(dict(cin=g_hidden, cout=image_channel, k=4, s=2, p=1, act="tanh"))

    params = []
    for cfg in cfgs:
        key, kw, kg, kb = jax.random.split(key, 4)
        w = 0.05 * jax.random.normal(kw, (cfg["cin"], cfg["cout"], cfg["k"], cfg["k"]),
                                     dtype=jnp.float32)
        gamma = 1.0 + 0.1 * jax.random.normal(kg, (cfg["cout"],), dtype=jnp.float32)
        beta = 0.1 * jax.random.normal(kb, (cfg["cout"],), dtype=jnp.float32)
        params.append(dict(w=w, gamma=gamma, beta=beta, **cfg))
    return params


def prepare_generator(params):
    """Fold each ConvTranspose2d into a dense (Ci*H*W, Co*Ho*Wo) matrix
    (channel-major rows/cols), cast to bf16 for the MXU, and build the bf16
    0/1 channel-selector matrices + stacked (gamma;beta) used by the in-kernel
    train-mode BatchNorm."""
    # TODO(synk): for large x_dim configs the dense fold grows as (spatial)^2 and
    # does Ho*Wo/k^2 redundant FLOPs; later layers should switch to an
    # im2col / block-sparse formulation and K/F_out grid tiling (review #7/#8).
    layers = []
    h = w = 1  # z is (N, latent, 1, 1)
    for cfg in params:
        k, s, pad = cfg["k"], cfg["s"], cfg["p"]
        ci, co = cfg["cin"], cfg["cout"]
        ho = (h - 1) * s - 2 * pad + k
        wo = (w - 1) * s - 2 * pad + k
        th = jnp.asarray(_scatter_table(h, k, s, pad, ho))
        tw = jnp.asarray(_scatter_table(w, k, s, pad, wo))
        # M[(ci,h,w),(co,oh,ow)] = W[ci,co,oh-h*s+p, ow-w*s+p] (0 outside kernel)
        m6 = jnp.einsum("iokl,hkp,wlq->ihwopq", cfg["w"], th, tw)
        mat = m6.reshape(ci * h * w, co * ho * wo).astype(jnp.bfloat16)
        layer = dict(mat=mat, act=cfg["act"], cout=co, ho=ho, wo=wo)
        if cfg["act"] == "bn_relu":
            # psel[j, c] = 1 iff column j belongs to channel c (channel-major cols)
            psel = np.repeat(np.eye(co, dtype=np.float32), ho * wo, axis=0)  # (F, Co)
            layer["gb"] = jnp.stack([cfg["gamma"], cfg["beta"]], axis=0)     # (2, Co) f32
            layer["p"] = jnp.asarray(psel, dtype=jnp.bfloat16)               # (F, Co)
            layer["pt"] = jnp.asarray(psel.T, dtype=jnp.bfloat16)            # (Co, F)
        layers.append(layer)
        h, w = ho, wo
    return layers


# --------------------------------------------------------------------------
# Fused generator kernel (single pallas_call for the whole network).
# --------------------------------------------------------------------------

def _make_fused_kernel(layer_meta, n_real, n_pad, eps=1e-5):
    """layer_meta: per layer {'act': str, 'count': n_real*Ho*Wo (static int)}."""
    need_mask = n_pad > n_real

    def kernel(*refs):
        out_ref = refs[-1]
        it = iter(refs[:-1])
        x = next(it)[...]                                    # (n_pad, latent) f32

        # Hoisted constants (emitted once, reused by every layer).
        ridx = jax.lax.broadcasted_iota(jnp.int32, (2, 1), 0)
        top = (ridx == 0).astype(jnp.float32)                # (2,1): [1;0]
        bot = 1.0 - top                                      # (2,1): [0;1]
        if need_mask:
            rows = jax.lax.broadcasted_iota(jnp.int32, (n_pad, 1), 0)
            row_mask = (rows < n_real).astype(jnp.float32)   # zero out pad rows

        for meta in layer_meta:
            m = next(it)[...]                                # (F_in, F_out) bf16
            # Transposed conv == one lane-dense matmul (bf16 in, f32 accumulate).
            y = jnp.dot(x.astype(jnp.bfloat16), m,
                        preferred_element_type=jnp.float32)  # (n_pad, F) f32
            if meta["act"] == "bn_relu":
                gb = next(it)[...]                           # (2, Co) f32 [gamma; beta]
                p = next(it)[...]                            # (F, Co) bf16
                pt = next(it)[...]                           # (Co, F) bf16
                inv_cnt = 1.0 / meta["count"]

                # Train-mode BatchNorm2d: stats over (N, Ho, Wo) per channel,
                # biased variance, eps=1e-5.  Two aux dots total per layer.
                sum_y = jnp.sum(y, axis=0, keepdims=True)         # (1, F)
                sum_yy = jnp.sum(y * y, axis=0, keepdims=True)    # (1, F)
                sums2 = top * sum_y + bot * sum_yy                # (2, F)
                stats = jnp.dot(sums2.astype(jnp.bfloat16), p,
                                preferred_element_type=jnp.float32) * inv_cnt  # (2, Co)
                mean = stats[0:1, :]                              # (1, Co)
                ex2 = stats[1:2, :]                               # (1, Co)
                var = jnp.maximum(ex2 - mean * mean, 0.0)
                scale = gb[0:1, :] * jax.lax.rsqrt(var + eps)     # (1, Co)
                shift = gb[1:2, :] - mean * scale                 # (1, Co)
                coef2 = top * scale + bot * shift                 # (2, Co)
                cols = jnp.dot(coef2.astype(jnp.bfloat16), pt,
                               preferred_element_type=jnp.float32)  # (2, F)
                x = jnp.maximum(y * cols[0:1, :] + cols[1:2, :], 0.0)  # BN + ReLU
                if need_mask:
                    x = x * row_mask            # keep pad rows exactly zero
            else:
                x = jnp.tanh(y)                 # final Tanh
        out_ref[...] = x.astype(out_ref.dtype)

    return kernel


def generator_forward(prepared, z):
    """Forward pass: exactly one Pallas kernel dispatch + host reshape/slice."""
    n = z.shape[0]
    # Pad the row (MXU M) axis up to a sublane multiple (>=8).
    n_pad = max(8, ((n + 7) // 8) * 8)
    x0 = z.reshape(n, -1).astype(jnp.float32)                # (N, latent)
    if n_pad != n:
        x0 = jnp.pad(x0, ((0, n_pad - n), (0, 0)))

    inputs = [x0]
    layer_meta = []
    for layer in prepared:
        inputs.append(layer["mat"])
        if layer["act"] == "bn_relu":
            inputs.extend([layer["gb"], layer["p"], layer["pt"]])
        layer_meta.append(dict(act=layer["act"], count=n * layer["ho"] * layer["wo"]))

    last = prepared[-1]
    co, ho, wo = last["cout"], last["ho"], last["wo"]
    f_out = co * ho * wo                                     # lane-dense (mult. of 128)

    # Whole-array blocks, constant index_map: weights/selectors are fetched once
    # and stay VMEM-resident for the call (total footprint ~2-4 MiB here).
    in_specs = [pl.BlockSpec(a.shape, lambda i: (0, 0)) for a in inputs]
    out2d = pl.pallas_call(
        _make_fused_kernel(layer_meta, n, n_pad),
        out_shape=jax.ShapeDtypeStruct((n_pad, f_out), jnp.float32),
        grid=(1,),
        in_specs=in_specs,
        out_specs=pl.BlockSpec((n_pad, f_out), lambda i: (0, 0)),
        compiler_params=pltpu.CompilerParams(dimension_semantics=("parallel",)),
    )(*inputs)
    # Channel-major columns == NCHW directly (no transpose needed).
    return out2d[:n].reshape(n, co, ho, wo)


# --------------------------------------------------------------------------

if __name__ == "__main__":
    # Small configuration: x_dim=8 -> poweroftwo=2, n_layers=1.
    # Layers: (16 -> 16, 1x1 -> 4x4), (16 -> 8, 4x4 -> 8x8), (8 -> 3, 8x8 -> 16x16).
    # Note: this architecture (faithfully reproduced) outputs 2*x_dim spatially.
    # Batch of 16 rows per call amortizes dispatch/weight DMA and fills 16 MXU rows.
    X_DIM, IMAGE_CHANNEL, LATENT_DIM, G_HIDDEN, BATCH = 8, 3, 16, 8, 16

    root = jax.random.PRNGKey(0)
    kz, kp = jax.random.split(root)
    z = jax.random.normal(kz, (BATCH, LATENT_DIM, 1, 1), dtype=jnp.float32)
    params = init_generator_params(kp, x_dim=X_DIM, image_channel=IMAGE_CHANNEL,
                                   latent_dim=LATENT_DIM, g_hidden=G_HIDDEN)
    prepared = prepare_generator(params)     # one-time weight folding (not per call)

    out = generator_forward(prepared, z)
    out = jax.block_until_ready(out)

    assert out.shape == (BATCH, IMAGE_CHANNEL, 2 * X_DIM, 2 * X_DIM), out.shape
    assert bool(jnp.all(jnp.isfinite(out)))
    assert bool(jnp.all(jnp.abs(out) <= 1.0))  # tanh output range
    print("KERNEL_OK")
</pallas_src>

<mosaic_0001>
module attributes {stable_mosaic.version = 11 : i64} {
  func.func @kernel(%arg0: i32, %arg1: memref<16x16xf32, #tpu.memory_space<vmem>>, %arg2: memref<16x256xbf16, #tpu.memory_space<vmem>>, %arg3: memref<2x16xf32, #tpu.memory_space<vmem>>, %arg4: memref<256x16xbf16, #tpu.memory_space<vmem>>, %arg5: memref<16x256xbf16, #tpu.memory_space<vmem>>, %arg6: memref<256x512xbf16, #tpu.memory_space<vmem>>, %arg7: memref<2x8xf32, #tpu.memory_space<vmem>>, %arg8: memref<512x8xbf16, #tpu.memory_space<vmem>>, %arg9: memref<8x512xbf16, #tpu.memory_space<vmem>>, %arg10: memref<512x768xbf16, #tpu.memory_space<vmem>>, %arg11: memref<16x768xf32, #tpu.memory_space<vmem>>) attributes {dimension_semantics = [#tpu.dimension_semantics<parallel>], iteration_bounds = array<i64: 1>, scalar_prefetch = 0 : i64, scratch_operands = 0 : i64, tpu.core_type = #tpu.core_type<tc>, window_params = [{pipeline_mode = #tpu.pipeline_mode<synchronous>, transform_indices = @transform_0, window_bounds = array<i64: 16, 16>}, {pipeline_mode = #tpu.pipeline_mode<synchronous>, transform_indices = @transform_1, window_bounds = array<i64: 16, 256>}, {pipeline_mode = #tpu.pipeline_mode<synchronous>, transform_indices = @transform_2, window_bounds = array<i64: 2, 16>}, {pipeline_mode = #tpu.pipeline_mode<synchronous>, transform_indices = @transform_3, window_bounds = array<i64: 256, 16>}, {pipeline_mode = #tpu.pipeline_mode<synchronous>, transform_indices = @transform_4, window_bounds = array<i64: 16, 256>}, {pipeline_mode = #tpu.pipeline_mode<synchronous>, transform_indices = @transform_5, window_bounds = array<i64: 256, 512>}, {pipeline_mode = #tpu.pipeline_mode<synchronous>, transform_indices = @transform_6, window_bounds = array<i64: 2, 8>}, {pipeline_mode = #tpu.pipeline_mode<synchronous>, transform_indices = @transform_7, window_bounds = array<i64: 512, 8>}, {pipeline_mode = #tpu.pipeline_mode<synchronous>, transform_indices = @transform_8, window_bounds = array<i64: 8, 512>}, {pipeline_mode = #tpu.pipeline_mode<synchronous>, transform_indices = @transform_9, window_bounds = array<i64: 512, 768>}, {pipeline_mode = #tpu.pipeline_mode<synchronous>, transform_indices = @transform_10, window_bounds = array<i64: 16, 768>}]} {
    %c0 = arith.constant 0 : index
    %c0_0 = arith.constant 0 : index
    %0 = vector.load %arg1[%c0, %c0_0] : memref<16x16xf32, #tpu.memory_space<vmem>>, vector<16x16xf32>
    %1 = tpu.iota {dimensions = array<i32: 0>} : vector<2x1xi32>
    %c0_i32 = arith.constant 0 : i32
    %2 = vector.broadcast %c0_i32 : i32 to vector<2x1xi32>
    %3 = arith.cmpi eq, %1, %2 : vector<2x1xi32>
    %4 = arith.extui %3 : vector<2x1xi1> to vector<2x1xi32>
    %5 = arith.sitofp %4 : vector<2x1xi32> to vector<2x1xf32>
    %cst = arith.constant 1.000000e+00 : f32
    %6 = vector.broadcast %cst : f32 to vector<2x1xf32>
    %7 = arith.subf %6, %5 : vector<2x1xf32>
    %c0_1 = arith.constant 0 : index
    %c0_2 = arith.constant 0 : index
    %8 = vector.load %arg2[%c0_1, %c0_2] : memref<16x256xbf16, #tpu.memory_space<vmem>>, vector<16x256xbf16>
    %9 = arith.truncf %0 : vector<16x16xf32> to vector<16x16xbf16>
    %cst_3 = arith.constant dense<0.000000e+00> : vector<16x256xf32>
    %10 = tpu.matmul %9, %8, %cst_3 {dimension_numbers = #tpu.dot_dimension_numbers<[1], [0], [0], [1], [0, 0, 1, 1], [], []>} : vector<16x16xbf16>, vector<16x256xbf16>, vector<16x256xf32> -> vector<16x256xf32>
    %c0_4 = arith.constant 0 : index
    %c0_5 = arith.constant 0 : index
    %11 = vector.load %arg3[%c0_4, %c0_5] : memref<2x16xf32, #tpu.memory_space<vmem>>, vector<2x16xf32>
    %c0_6 = arith.constant 0 : index
    %c0_7 = arith.constant 0 : index
    %12 = vector.load %arg4[%c0_6, %c0_7] : memref<256x16xbf16, #tpu.memory_space<vmem>>, vector<256x16xbf16>
    %c0_8 = arith.constant 0 : index
    %c0_9 = arith.constant 0 : index
    %13 = vector.load %arg5[%c0_8, %c0_9] : memref<16x256xbf16, #tpu.memory_space<vmem>>, vector<16x256xbf16>
    %cst_10 = arith.constant dense<0.000000e+00> : vector<256xf32>
    %14 = vector.multi_reduction <add>, %10, %cst_10 [0] : vector<16x256xf32> to vector<256xf32>
    %15 = vector.shape_cast %14 : vector<256xf32> to vector<1x256xf32>
    %16 = arith.mulf %10, %10 : vector<16x256xf32>
    %cst_11 = arith.constant dense<0.000000e+00> : vector<256xf32>
    %17 = vector.multi_reduction <add>, %16, %cst_11 [0] : vector<16x256xf32> to vector<256xf32>
    %18 = vector.shape_cast %17 : vector<256xf32> to vector<1x256xf32>
    %19 = vector.broadcast %5 : vector<2x1xf32> to vector<2x256xf32>
    %20 = vector.broadcast %15 : vector<1x256xf32> to vector<2x256xf32>
    %21 = arith.mulf %19, %20 : vector<2x256xf32>
    %22 = vector.broadcast %7 : vector<2x1xf32> to vector<2x256xf32>
    %23 = vector.broadcast %18 : vector<1x256xf32> to vector<2x256xf32>
    %24 = arith.mulf %22, %23 : vector<2x256xf32>
    %25 = arith.addf %21, %24 : vector<2x256xf32>
    %26 = arith.truncf %25 : vector<2x256xf32> to vector<2x256xbf16>
    %cst_12 = arith.constant dense<0.000000e+00> : vector<2x16xf32>
    %27 = tpu.matmul %26, %12, %cst_12 {dimension_numbers = #tpu.dot_dimension_numbers<[1], [0], [0], [1], [0, 0, 1, 1], [], []>} : vector<2x256xbf16>, vector<256x16xbf16>, vector<2x16xf32> -> vector<2x16xf32>
    %cst_13 = arith.constant 3.906250e-03 : f32
    %28 = vector.broadcast %cst_13 : f32 to vector<2x16xf32>
    %29 = arith.mulf %27, %28 : vector<2x16xf32>
    %30 = vector.extract_strided_slice %29 {offsets = [0, 0], sizes = [1, 16], strides = [1, 1]} : vector<2x16xf32> to vector<1x16xf32>
    %31 = vector.extract_strided_slice %29 {offsets = [1, 0], sizes = [1, 16], strides = [1, 1]} : vector<2x16xf32> to vector<1x16xf32>
    %32 = arith.mulf %30, %30 : vector<1x16xf32>
    %33 = arith.subf %31, %32 : vector<1x16xf32>
    %cst_14 = arith.constant 0.000000e+00 : f32
    %34 = vector.broadcast %cst_14 : f32 to vector<1x16xf32>
    %35 = arith.maximumf %33, %34 : vector<1x16xf32>
    %36 = vector.extract_strided_slice %11 {offsets = [0, 0], sizes = [1, 16], strides = [1, 1]} : vector<2x16xf32> to vector<1x16xf32>
    %cst_15 = arith.constant 9.99999974E-6 : f32
    %37 = vector.broadcast %cst_15 : f32 to vector<1x16xf32>
    %38 = arith.addf %35, %37 : vector<1x16xf32>
    %39 = math.rsqrt %38 : vector<1x16xf32>
    %40 = arith.mulf %36, %39 : vector<1x16xf32>
    %41 = vector.extract_strided_slice %11 {offsets = [1, 0], sizes = [1, 16], strides = [1, 1]} : vector<2x16xf32> to vector<1x16xf32>
    %42 = arith.mulf %30, %40 : vector<1x16xf32>
    %43 = arith.subf %41, %42 : vector<1x16xf32>
    %44 = vector.broadcast %5 : vector<2x1xf32> to vector<2x16xf32>
    %45 = vector.broadcast %40 : vector<1x16xf32> to vector<2x16xf32>
    %46 = arith.mulf %44, %45 : vector<2x16xf32>
    %47 = vector.broadcast %7 : vector<2x1xf32> to vector<2x16xf32>
    %48 = vector.broadcast %43 : vector<1x16xf32> to vector<2x16xf32>
    %49 = arith.mulf %47, %48 : vector<2x16xf32>
    %50 = arith.addf %46, %49 : vector<2x16xf32>
    %51 = arith.truncf %50 : vector<2x16xf32> to vector<2x16xbf16>
    %cst_16 = arith.constant dense<0.000000e+00> : vector<2x256xf32>
    %52 = tpu.matmul %51, %13, %cst_16 {dimension_numbers = #tpu.dot_dimension_numbers<[1], [0], [0], [1], [0, 0, 1, 1], [], []>} : vector<2x16xbf16>, vector<16x256xbf16>, vector<2x256xf32> -> vector<2x256xf32>
    %53 = vector.extract_strided_slice %52 {offsets = [0, 0], sizes = [1, 256], strides = [1, 1]} : vector<2x256xf32> to vector<1x256xf32>
    %54 = vector.broadcast %53 : vector<1x256xf32> to vector<16x256xf32>
    %55 = arith.mulf %10, %54 : vector<16x256xf32>
    %56 = vector.extract_strided_slice %52 {offsets = [1, 0], sizes = [1, 256], strides = [1, 1]} : vector<2x256xf32> to vector<1x256xf32>
    %57 = vector.broadcast %56 : vector<1x256xf32> to vector<16x256xf32>
    %58 = arith.addf %55, %57 : vector<16x256xf32>
    %cst_17 = arith.constant 0.000000e+00 : f32
    %59 = vector.broadcast %cst_17 : f32 to vector<16x256xf32>
    %60 = arith.maximumf %58, %59 : vector<16x256xf32>
    %c0_18 = arith.constant 0 : index
    %c0_19 = arith.constant 0 : index
    %61 = vector.load %arg6[%c0_18, %c0_19] : memref<256x512xbf16, #tpu.memory_space<vmem>>, vector<256x512xbf16>
    %62 = arith.truncf %60 : vector<16x256xf32> to vector<16x256xbf16>
    %cst_20 = arith.constant dense<0.000000e+00> : vector<16x512xf32>
    %63 = tpu.matmul %62, %61, %cst_20 {dimension_numbers = #tpu.dot_dimension_numbers<[1], [0], [0], [1], [0, 0, 1, 1], [], []>} : vector<16x256xbf16>, vector<256x512xbf16>, vector<16x512xf32> -> vector<16x512xf32>
    %c0_21 = arith.constant 0 : index
    %c0_22 = arith.constant 0 : index
    %64 = vector.load %arg7[%c0_21, %c0_22] : memref<2x8xf32, #tpu.memory_space<vmem>>, vector<2x8xf32>
    %c0_23 = arith.constant 0 : index
    %c0_24 = arith.constant 0 : index
    %65 = vector.load %arg8[%c0_23, %c0_24] : memref<512x8xbf16, #tpu.memory_space<vmem>>, vector<512x8xbf16>
    %c0_25 = arith.constant 0 : index
    %c0_26 = arith.constant 0 : index
    %66 = vector.load %arg9[%c0_25, %c0_26] : memref<8x512xbf16, #tpu.memory_space<vmem>>, vector<8x512xbf16>
    %cst_27 = arith.constant dense<0.000000e+00> : vector<512xf32>
    %67 = vector.multi_reduction <add>, %63, %cst_27 [0] : vector<16x512xf32> to vector<512xf32>
    %68 = vector.shape_cast %67 : vector<512xf32> to vector<1x512xf32>
    %69 = arith.mulf %63, %63 : vector<16x512xf32>
    %cst_28 = arith.constant dense<0.000000e+00> : vector<512xf32>
    %70 = vector.multi_reduction <add>, %69, %cst_28 [0] : vector<16x512xf32> to vector<512xf32>
    %71 = vector.shape_cast %70 : vector<512xf32> to vector<1x512xf32>
    %72 = vector.broadcast %5 : vector<2x1xf32> to vector<2x512xf32>
    %73 = vector.broadcast %68 : vector<1x512xf32> to vector<2x512xf32>
    %74 = arith.mulf %72, %73 : vector<2x512xf32>
    %75 = vector.broadcast %7 : vector<2x1xf32> to vector<2x512xf32>
    %76 = vector.broadcast %71 : vector<1x512xf32> to vector<2x512xf32>
    %77 = arith.mulf %75, %76 : vector<2x512xf32>
    %78 = arith.addf %74, %77 : vector<2x512xf32>
    %79 = arith.truncf %78 : vector<2x512xf32> to vector<2x512xbf16>
    %cst_29 = arith.constant dense<0.000000e+00> : vector<2x8xf32>
    %80 = tpu.matmul %79, %65, %cst_29 {dimension_numbers = #tpu.dot_dimension_numbers<[1], [0], [0], [1], [0, 0, 1, 1], [], []>} : vector<2x512xbf16>, vector<512x8xbf16>, vector<2x8xf32> -> vector<2x8xf32>
    %cst_30 = arith.constant 9.765625E-4 : f32
    %81 = vector.broadcast %cst_30 : f32 to vector<2x8xf32>
    %82 = arith.mulf %80, %81 : vector<2x8xf32>
    %83 = vector.extract_strided_slice %82 {offsets = [0, 0], sizes = [1, 8], strides = [1, 1]} : vector<2x8xf32> to vector<1x8xf32>
    %84 = vector.extract_strided_slice %82 {offsets = [1, 0], sizes = [1, 8], strides = [1, 1]} : vector<2x8xf32> to vector<1x8xf32>
    %85 = arith.mulf %83, %83 : vector<1x8xf32>
    %86 = arith.subf %84, %85 : vector<1x8xf32>
    %cst_31 = arith.constant 0.000000e+00 : f32
    %87 = vector.broadcast %cst_31 : f32 to vector<1x8xf32>
    %88 = arith.maximumf %86, %87 : vector<1x8xf32>
    %89 = vector.extract_strided_slice %64 {offsets = [0, 0], sizes = [1, 8], strides = [1, 1]} : vector<2x8xf32> to vector<1x8xf32>
    %cst_32 = arith.constant 9.99999974E-6 : f32
    %90 = vector.broadcast %cst_32 : f32 to vector<1x8xf32>
    %91 = arith.addf %88, %90 : vector<1x8xf32>
    %92 = math.rsqrt %91 : vector<1x8xf32>
    %93 = arith.mulf %89, %92 : vector<1x8xf32>
    %94 = vector.extract_strided_slice %64 {offsets = [1, 0], sizes = [1, 8], strides = [1, 1]} : vector<2x8xf32> to vector<1x8xf32>
    %95 = arith.mulf %83, %93 : vector<1x8xf32>
    %96 = arith.subf %94, %95 : vector<1x8xf32>
    %97 = vector.broadcast %5 : vector<2x1xf32> to vector<2x8xf32>
    %98 = vector.broadcast %93 : vector<1x8xf32> to vector<2x8xf32>
    %99 = arith.mulf %97, %98 : vector<2x8xf32>
    %100 = vector.broadcast %7 : vector<2x1xf32> to vector<2x8xf32>
    %101 = vector.broadcast %96 : vector<1x8xf32> to vector<2x8xf32>
    %102 = arith.mulf %100, %101 : vector<2x8xf32>
    %103 = arith.addf %99, %102 : vector<2x8xf32>
    %104 = arith.truncf %103 : vector<2x8xf32> to vector<2x8xbf16>
    %cst_33 = arith.constant dense<0.000000e+00> : vector<2x512xf32>
    %105 = tpu.matmul %104, %66, %cst_33 {dimension_numbers = #tpu.dot_dimension_numbers<[1], [0], [0], [1], [0, 0, 1, 1], [], []>} : vector<2x8xbf16>, vector<8x512xbf16>, vector<2x512xf32> -> vector<2x512xf32>
    %106 = vector.extract_strided_slice %105 {offsets = [0, 0], sizes = [1, 512], strides = [1, 1]} : vector<2x512xf32> to vector<1x512xf32>
    %107 = vector.broadcast %106 : vector<1x512xf32> to vector<16x512xf32>
    %108 = arith.mulf %63, %107 : vector<16x512xf32>
    %109 = vector.extract_strided_slice %105 {offsets = [1, 0], sizes = [1, 512], strides = [1, 1]} : vector<2x512xf32> to vector<1x512xf32>
    %110 = vector.broadcast %109 : vector<1x512xf32> to vector<16x512xf32>
    %111 = arith.addf %108, %110 : vector<16x512xf32>
    %cst_34 = arith.constant 0.000000e+00 : f32
    %112 = vector.broadcast %cst_34 : f32 to vector<16x512xf32>
    %113 = arith.maximumf %111, %112 : vector<16x512xf32>
    %c0_35 = arith.constant 0 : index
    %c0_36 = arith.constant 0 : index
    %114 = vector.load %arg10[%c0_35, %c0_36] : memref<512x768xbf16, #tpu.memory_space<vmem>>, vector<512x768xbf16>
    %115 = arith.truncf %113 : vector<16x512xf32> to vector<16x512xbf16>
    %cst_37 = arith.constant dense<0.000000e+00> : vector<16x768xf32>
    %116 = tpu.matmul %115, %114, %cst_37 {dimension_numbers = #tpu.dot_dimension_numbers<[1], [0], [0], [1], [0, 0, 1, 1], [], []>} : vector<16x512xbf16>, vector<512x768xbf16>, vector<16x768xf32> -> vector<16x768xf32>
    %117 = math.tanh %116 : vector<16x768xf32>
    %c0_38 = arith.constant 0 : index
    %c0_39 = arith.constant 0 : index
    %118 = vector.load %arg11[%c0_38, %c0_39] : memref<16x768xf32, #tpu.memory_space<vmem>>, vector<16x768xf32>
    tpu.vector_store %arg11[%c0_38, %c0_39], %117 {strides = array<i32>} : memref<16x768xf32, #tpu.memory_space<vmem>>, vector<16x768xf32>,
    return
  }
  func.func @transform_0(%arg0: i32) -> (i32, i32) {
    %c0_i32 = arith.constant 0 : i32
    %c0_i32_0 = arith.constant 0 : i32
    %c0_i32_1 = arith.constant 0 : i32
    return %c0_i32, %c0_i32_0 : i32, i32
  }
  func.func @transform_1(%arg0: i32) -> (i32, i32) {
    %c0_i32 = arith.constant 0 : i32
    %c0_i32_0 = arith.constant 0 : i32
    %c0_i32_1 = arith.constant 0 : i32
    return %c0_i32, %c0_i32_0 : i32, i32
  }
  func.func @transform_2(%arg0: i32) -> (i32, i32) {
    %c0_i32 = arith.constant 0 : i32
    %c0_i32_0 = arith.constant 0 : i32
    %c0_i32_1 = arith.constant 0 : i32
    return %c0_i32, %c0_i32_0 : i32, i32
  }
  func.func @transform_3(%arg0: i32) -> (i32, i32) {
    %c0_i32 = arith.constant 0 : i32
    %c0_i32_0 = arith.constant 0 : i32
    %c0_i32_1 = arith.constant 0 : i32
    return %c0_i32, %c0_i32_0 : i32, i32
  }
  func.func @transform_4(%arg0: i32) -> (i32, i32) {
    %c0_i32 = arith.constant 0 : i32
    %c0_i32_0 = arith.constant 0 : i32
    %c0_i32_1 = arith.constant 0 : i32
    return %c0_i32, %c0_i32_0 : i32, i32
  }
  func.func @transform_5(%arg0: i32) -> (i32, i32) {
    %c0_i32 = arith.constant 0 : i32
    %c0_i32_0 = arith.constant 0 : i32
    %c0_i32_1 = arith.constant 0 : i32
    return %c0_i32, %c0_i32_0 : i32, i32
  }
  func.func @transform_6(%arg0: i32) -> (i32, i32) {
    %c0_i32 = arith.constant 0 : i32
    %c0_i32_0 = arith.constant 0 : i32
    %c0_i32_1 = arith.constant 0 : i32
    return %c0_i32, %c0_i32_0 : i32, i32
  }
  func.func @transform_7(%arg0: i32) -> (i32, i32) {
    %c0_i32 = arith.constant 0 : i32
    %c0_i32_0 = arith.constant 0 : i32
    %c0_i32_1 = arith.constant 0 : i32
    return %c0_i32, %c0_i32_0 : i32, i32
  }
  func.func @transform_8(%arg0: i32) -> (i32, i32) {
    %c0_i32 = arith.constant 0 : i32
    %c0_i32_0 = arith.constant 0 : i32
    %c0_i32_1 = arith.constant 0 : i32
    return %c0_i32, %c0_i32_0 : i32, i32
  }
  func.func @transform_9(%arg0: i32) -> (i32, i32) {
    %c0_i32 = arith.constant 0 : i32
    %c0_i32_0 = arith.constant 0 : i32
    %c0_i32_1 = arith.constant 0 : i32
    return %c0_i32, %c0_i32_0 : i32, i32
  }
  func.func @transform_10(%arg0: i32) -> (i32, i32) {
    %c0_i32 = arith.constant 0 : i32
    %c0_i32_0 = arith.constant 0 : i32
    %c0_i32_1 = arith.constant 0 : i32
    return %c0_i32, %c0_i32_0 : i32, i32
  }
}

</mosaic_0001>

<llo_original>
// kernel: tpu_custom_call.1
$region0: #{tpu_custom_call.1}
  #allocation0 [shape = 'u32[]', space=smem, size = 0x4, offset = 0x4, fixed_abs, tag = 'smem constant byte address 0x4 - core index']
  #allocation1 [shape = 'u32[144,128]{1,0:T(1,128)}', space=vmem, size = 0x12000, scoped, tag = 'internal scratch']
  %s0 = inlined_call_operand.vmem [shape: f32[16,16], index: 0, kind: input, shape index: {}]
  %s1 = inlined_call_operand.vmem [shape: bf16[16,256], index: 1, kind: input, shape index: {}]
  %s2 = inlined_call_operand.vmem [shape: f32[2,16], index: 2, kind: input, shape index: {}]
  %s3 = inlined_call_operand.vmem [shape: bf16[256,16], index: 3, kind: input, shape index: {}]
  %s4 = inlined_call_operand.vmem [shape: bf16[16,256], index: 4, kind: input, shape index: {}]
  %s5 = inlined_call_operand.hbm [shape: bf16[256,512], index: 5, kind: input, shape index: {}]
  %s6 = inlined_call_operand.vmem [shape: f32[2,8], index: 6, kind: input, shape index: {}]
  %s7 = inlined_call_operand.vmem [shape: bf16[512,8], index: 7, kind: input, shape index: {}]
  %s8 = inlined_call_operand.vmem [shape: bf16[8,512], index: 8, kind: input, shape index: {}]
  %s9 = inlined_call_operand.hbm [shape: bf16[512,768], index: 9, kind: input, shape index: {}]
  %s10 = inlined_call_operand.hbm [shape: f32[16,768], index: 10, kind: output, shape index: {}]
  %s11 = sld [smem:[#allocation0]]
  $region58: #{tpu_custom_call.1} parent=0
    _
  %s13 = ssub.s32 1, %s11
  %s14 = scalar_select 0, %s13, %s11
  $region1: #{tpu_custom_call.1} parent=0
    #allocation2 [shape = 'u8[262144]{0}', space=vmem, size = 0x40000, scoped, tag = 'input window, operand 5, single buffered']
    #allocation3 [shape = 's32[1]{0}', space=sflag, size = 0x4, scoped, tag = 'scoped memory for tpu_custom_call.1']
    #allocation4 [shape = 's32[1]{0}', space=sflag, size = 0x4, scoped, tag = 'scoped memory for tpu_custom_call.1']
    #allocation5 [shape = 'u8[786432]{0}', space=vmem, size = 0xc0000, scoped, tag = 'input window, operand 9, single buffered']
    #allocation6 [shape = 's32[1]{0}', space=sflag, size = 0x4, scoped, tag = 'scoped memory for tpu_custom_call.1']
    #allocation7 [shape = 'u8[49152]{0}', space=vmem, size = 0xc000, scoped, tag = 'output window, operand 0, single buffered']
    %15 = vsyncpa [#allocation3], 0
    %16 = vsyncpa [#allocation6], 0
    %17 = vsyncpa [#allocation4], 0
    // Predicated region
    $region2: #{tpu_custom_call.1} parent=1 // pred_check
      _
    $region3: #{tpu_custom_call.1} parent=1 // pred_check_branch
      %19 = sbr.rel (0) target = $region5
    $region4: #{tpu_custom_call.1} parent=1 // pred_region
      _
    $region5: #{tpu_custom_call.1} parent=1 // pred_fallthru
      _
    // Predicated region
    $region6: #{tpu_custom_call.1} parent=1 // pred_check
      _
    $region7: #{tpu_custom_call.1} parent=1 // pred_check_branch
      %21 = sbr.rel (0) target = $region9
    $region8: #{tpu_custom_call.1} parent=1 // pred_region
      _
    $region9: #{tpu_custom_call.1} parent=1 // pred_fallthru
      _
    // Predicated region
    $region10: #{tpu_custom_call.1} parent=1 // pred_check
      _
    $region11: #{tpu_custom_call.1} parent=1 // pred_check_branch
      %23 = sbr.rel (0) target = $region13
    $region12: #{tpu_custom_call.1} parent=1 // pred_region
      _
    $region13: #{tpu_custom_call.1} parent=1 // pred_fallthru
      _
    // Predicated region
    $region14: #{tpu_custom_call.1} parent=1 // pred_check
      _
    $region15: #{tpu_custom_call.1} parent=1 // pred_check_branch
      %25 = sbr.rel (0) target = $region17
    $region16: #{tpu_custom_call.1} parent=1 // pred_region
      _
    $region17: #{tpu_custom_call.1} parent=1 // pred_fallthru
      _
    // Predicated region
    $region18: #{tpu_custom_call.1} parent=1 // pred_check
      _
    $region19: #{tpu_custom_call.1} parent=1 // pred_check_branch
      %27 = sbr.rel (0) target = $region21
    $region20: #{tpu_custom_call.1} parent=1 // pred_region
      _
    $region21: #{tpu_custom_call.1} parent=1 // pred_fallthru
      _
    // Predicated region
    $region22: #{tpu_custom_call.1} parent=1 // pred_check
      _
    $region23: #{tpu_custom_call.1} parent=1 // pred_check_branch
      %29 = sbr.rel (0) target = $region25
    $region24: #{tpu_custom_call.1} parent=1 // pred_region
      %s31 = ssub.s32 8192, 8192
      %32 = vsyncadd [#allocation3], %s31
      %s33 = sshll.u32 [#allocation2], 4
      %s34 = int_to_ptr.vmem [resolvable:$true] %s33
      %39 = dma.hbm_to_vmem [thread:$0]  %s5, 8192, %s34, [#allocation3], 256, 256, 16
    $region25: #{tpu_custom_call.1} parent=1 // pred_fallthru
      _
    // Predicated region
    $region26: #{tpu_custom_call.1} parent=1 // pred_check
      _
    $region27: #{tpu_custom_call.1} parent=1 // pred_check_branch
      %41 = sbr.rel (0) target = $region29
    $region28: #{tpu_custom_call.1} parent=1 // pred_region
      _
    $region29: #{tpu_custom_call.1} parent=1 // pred_fallthru
      _
    // Predicated region
    $region30: #{tpu_custom_call.1} parent=1 // pred_check
      _
    $region31: #{tpu_custom_call.1} parent=1 // pred_check_branch
      %43 = sbr.rel (0) target = $region33
    $region32: #{tpu_custom_call.1} parent=1 // pred_region
      _
    $region33: #{tpu_custom_call.1} parent=1 // pred_fallthru
      _
    // Predicated region
    $region34: #{tpu_custom_call.1} parent=1 // pred_check
      _
    $region35: #{tpu_custom_call.1} parent=1 // pred_check_branch
      %45 = sbr.rel (0) target = $region37
    $region36: #{tpu_custom_call.1} parent=1 // pred_region
      _
    $region37: #{tpu_custom_call.1} parent=1 // pred_fallthru
      _
    // Predicated region
    $region38: #{tpu_custom_call.1} parent=1 // pred_check
      _
    $region39: #{tpu_custom_call.1} parent=1 // pred_check_branch
      %47 = sbr.rel (0) target = $region41
    $region40: #{tpu_custom_call.1} parent=1 // pred_region
      %s49 = ssub.s32 24576, 24576
      %50 = vsyncadd [#allocation6], %s49
      %s51 = sshll.u32 [#allocation5], 4
      %s52 = int_to_ptr.vmem [resolvable:$true] %s51
      %57 = dma.hbm_to_vmem [thread:$0]  %s9, 24576, %s52, [#allocation6], 384, 384, 24
    $region41: #{tpu_custom_call.1} parent=1 // pred_fallthru
      _
    // Predicated region
    $region42: #{tpu_custom_call.1} parent=1 // pred_check
      _
    $region43: #{tpu_custom_call.1} parent=1 // pred_check_branch
      %59 = sbr.rel (0) target = $region45
    $region44: #{tpu_custom_call.1} parent=1 // pred_region
      %60 = dma.done [#allocation3], 8192
    $region45: #{tpu_custom_call.1} parent=1 // pred_fallthru
      _
    // Predicated region
    $region46: #{tpu_custom_call.1} parent=1 // pred_check
      _
    $region47: #{tpu_custom_call.1} parent=1 // pred_check_branch
      %62 = sbr.rel (0) target = $region49
    $region48: #{tpu_custom_call.1} parent=1 // pred_region
      %63 = dma.done [#allocation6], 24576
    $region49: #{tpu_custom_call.1} parent=1 // pred_fallthru
      _
    %v65 = vld [vmem:[%s0] sm:$0xff]
    %v66 = vld [vmem:[%s0 + $0x8] sm:$0xff]
    %v67 = vlaneseq
    %v68 = vshrl.u32 %v67, 7
    %vm69 = vcmp.eq.s32.totalorder %v68, 0
    %v70 = vsel %vm69, 1, 0
    %v71 = vcvt.s32.f32 %v70
    %v72 = vsub.f32 1.0, %v71
    %v73 = vld [vmem:[%s1] sm:$0xff]
    %v74 = vld [vmem:[%s1 + $0x8] sm:$0xff]
    %v75 = vpack.c.bf16 %v66, %v65
    %v78 = vunpack.c.l.b16 %v73
    %v79 = vunpack.c.h.b16 %v73
    %v80 = vunpack.c.l.b16 %v74
    %v81 = vunpack.c.h.b16 %v74
    %v82 = vpack.c.b16 %v80, %v78
    %v83 = vpack.c.b16 %v81, %v79
    %vm86 = vcmask 130048
    %v88 = vsel %vm86, %v75, 0
    %90 = vmatprep.subr.bf16.mxu0 %v83
    %91 = vmatpush1.bf16.msra.mxu0 %v82
    %92 = vmatprep.subr.bf16.mxu0 0
    %93 = vmatpush1.bf16.msra.mxu0 0
    %94 = vmatprep.subr.bf16.mxu0 0
    %95 = vmatpush1.bf16.msra.mxu0 0
    %96 = vmatprep.subr.bf16.mxu0 0
    %97 = vmatpush1.bf16.msra.mxu0 0
    %98 = vmatprep.subr.bf16.mxu0 0
    %99 = vmatpush1.bf16.msra.mxu0 0
    %100 = vmatprep.subr.bf16.mxu0 0
    %101 = vmatpush1.bf16.msra.mxu0 0
    %102 = vmatprep.subr.bf16.mxu0 0
    %103 = vmatpush1.bf16.msra.mxu0 0
    %104 = vmatprep.subr.bf16.mxu0 0
    %105 = vmatpush1.bf16.msra.mxu0 0
    %106 = vmatprep.subr.bf16.mxu0 0
    %107 = vmatpush1.bf16.msra.mxu0 0
    %108 = vmatprep.subr.bf16.mxu0 0
    %109 = vmatpush1.bf16.msra.mxu0 0
    %110 = vmatprep.subr.bf16.mxu0 0
    %111 = vmatpush1.bf16.msra.mxu0 0
    %112 = vmatprep.subr.bf16.mxu0 0
    %113 = vmatpush1.bf16.msra.mxu0 0
    %114 = vmatprep.subr.bf16.mxu0 0
    %115 = vmatpush1.bf16.msra.mxu0 0
    %116 = vmatprep.subr.bf16.mxu0 0
    %117 = vmatpush1.bf16.msra.mxu0 0
    %118 = vmatprep.subr.bf16.mxu0 0
    %119 = vmatpush1.bf16.msra.mxu0 0
    %120 = vmatprep.subr.bf16.mxu0 0
    %121 = vmatpush1.bf16.msra.mxu0 0
    %122 = vmatprep.mubr.bf16.mxu0 0
    %123 = vmatmul.mubr.bf16.gmra.mrb[0].mxu0 %v88
    %v124 = vpop.f32.mrb[0].mxu0
    %v125 = vadd.f32 0.0, %v124
    %v126 = vpop.f32.mrb[0].mxu0
    %v127 = vadd.f32 0.0, %v126
    %v128 = vpop.f32.mrb[0].mxu0
    %v129 = vadd.f32 0.0, %v128
    %v130 = vpop.f32.mrb[0].mxu0
    %v131 = vadd.f32 0.0, %v130
    %132 = vdwg.mxu0
    %v133 = vld [vmem:[%s2] sm:$0x3]
    %v134 = vld [vmem:[%s3] sm:$0xf]
    %v135 = vld [vmem:[%s3 + $0x4] sm:$0xf]
    %v136 = vld [vmem:[%s3 + $0x8] sm:$0xf]
    %v137 = vld [vmem:[%s3 + $0xc] sm:$0xf]
    %v138 = vld [vmem:[%s3 + $0x10] sm:$0xf]
    %v139 = vld [vmem:[%s3 + $0x14] sm:$0xf]
    %v140 = vld [vmem:[%s3 + $0x18] sm:$0xf]
    %v141 = vld [vmem:[%s3 + $0x1c] sm:$0xf]
    %v142 = vld [vmem:[%s3 + $0x20] sm:$0xf]
    %v143 = vld [vmem:[%s3 + $0x24] sm:$0xf]
    %v144 = vld [vmem:[%s3 + $0x28] sm:$0xf]
    %v145 = vld [vmem:[%s3 + $0x2c] sm:$0xf]
    %v146 = vld [vmem:[%s3 + $0x30] sm:$0xf]
    %v147 = vld [vmem:[%s3 + $0x34] sm:$0xf]
    %v148 = vld [vmem:[%s3 + $0x38] sm:$0xf]
    %v149 = vld [vmem:[%s3 + $0x3c] sm:$0xf]
    %v150 = vld [vmem:[%s3 + $0x40] sm:$0xf]
    %v151 = vld [vmem:[%s3 + $0x44] sm:$0xf]
    %v152 = vld [vmem:[%s3 + $0x48] sm:$0xf]
    %v153 = vld [vmem:[%s3 + $0x4c] sm:$0xf]
    %v154 = vld [vmem:[%s3 + $0x50] sm:$0xf]
    %v155 = vld [vmem:[%s3 + $0x54] sm:$0xf]
    %v156 = vld [vmem:[%s3 + $0x58] sm:$0xf]
    %v157 = vld [vmem:[%s3 + $0x5c] sm:$0xf]
    %v158 = vld [vmem:[%s3 + $0x60] sm:$0xf]
    %v159 = vld [vmem:[%s3 + $0x64] sm:$0xf]
    %v160 = vld [vmem:[%s3 + $0x68] sm:$0xf]
    %v161 = vld [vmem:[%s3 + $0x6c] sm:$0xf]
    %v162 = vld [vmem:[%s3 + $0x70] sm:$0xf]
    %v163 = vld [vmem:[%s3 + $0x74] sm:$0xf]
    %v164 = vld [vmem:[%s3 + $0x78] sm:$0xf]
    %v165 = vld [vmem:[%s3 + $0x7c] sm:$0xf]
    %v166 = vld [vmem:[%s4] sm:$0xff]
    %v167 = vld [vmem:[%s4 + $0x8] sm:$0xff]
    %v168 = vadd.f32 %v125, %v129
    %v169 = vrot.slane %v168, 4
    %v170 = vadd.f32 %v168, %v169
    %v171 = vrot.slane %v170, 2
    %v172 = vadd.f32 %v170, %v171
    %v173 = vrot.slane %v172, 1
    %v174 = vadd.f32 %v172, %v173
    %v175 = vadd.f32 %v127, %v131
    %v176 = vrot.slane %v175, 4
    %v177 = vadd.f32 %v175, %v176
    %v178 = vrot.slane %v177, 2
    %v179 = vadd.f32 %v177, %v178
    %v180 = vrot.slane %v179, 1
    %v181 = vadd.f32 %v179, %v180
    %v182 = vmul.f32 %v125, %v125
    %v183 = vmul.f32 %v127, %v127
    %v184 = vmul.f32 %v129, %v129
    %v185 = vmul.f32 %v131, %v131
    %v186 = vadd.f32 %v182, %v184
    %v187 = vrot.slane %v186, 4
    %v188 = vadd.f32 %v186, %v187
    %v189 = vrot.slane %v188, 2
    %v190 = vadd.f32 %v188, %v189
    %v191 = vrot.slane %v190, 1
    %v192 = vadd.f32 %v190, %v191
    %v193 = vadd.f32 %v183, %v185
    %v194 = vrot.slane %v193, 4
    %v195 = vadd.f32 %v193, %v194
    %v196 = vrot.slane %v195, 2
    %v197 = vadd.f32 %v195, %v196
    %v198 = vrot.slane %v197, 1
    %v199 = vadd.f32 %v197, %v198
    %v200 = vmul.f32 %v71, %v174
    %v201 = vmul.f32 %v71, %v181
    %v202 = vmul.f32 %v72, %v192
    %v203 = vmul.f32 %v72, %v199
    %v204 = vadd.f32 %v200, %v202
    %v205 = vadd.f32 %v201, %v203
    %v206 = vpack.c.bf16 %v204, %v204
    %v207 = vpack.c.bf16 %v205, %v205
    %v240 = vunpack.c.l.b16 %v134
    %v241 = vunpack.c.l.b16 %v135
    %v242 = vunpack.c.l.b16 %v136
    %v243 = vunpack.c.l.b16 %v137
    %v244 = vunpack.c.l.b16 %v138
    %v245 = vunpack.c.l.b16 %v139
    %v246 = vunpack.c.l.b16 %v140
    %v247 = vunpack.c.l.b16 %v141
    %v248 = vunpack.c.l.b16 %v142
    %v249 = vunpack.c.l.b16 %v143
    %v250 = vunpack.c.l.b16 %v144
    %v251 = vunpack.c.l.b16 %v145
    %v252 = vunpack.c.l.b16 %v146
    %v253 = vunpack.c.l.b16 %v147
    %v254 = vunpack.c.l.b16 %v148
    %v255 = vunpack.c.l.b16 %v149
    %v256 = vunpack.c.l.b16 %v150
    %v257 = vunpack.c.l.b16 %v151
    %v258 = vunpack.c.l.b16 %v152
    %v259 = vunpack.c.l.b16 %v153
    %v260 = vunpack.c.l.b16 %v154
    %v261 = vunpack.c.l.b16 %v155
    %v262 = vunpack.c.l.b16 %v156
    %v263 = vunpack.c.l.b16 %v157
    %v264 = vunpack.c.l.b16 %v158
    %v265 = vunpack.c.l.b16 %v159
    %v266 = vunpack.c.l.b16 %v160
    %v267 = vunpack.c.l.b16 %v161
    %v268 = vunpack.c.l.b16 %v162
    %v269 = vunpack.c.l.b16 %v163
    %v270 = vunpack.c.l.b16 %v164
    %v271 = vunpack.c.l.b16 %v165
    %v272 = vpack.c.b16 %v241, %v240
    %v273 = vpack.c.b16 %v243, %v242
    %v274 = vpack.c.b16 %v245, %v244
    %v275 = vpack.c.b16 %v247, %v246
    %v276 = vpack.c.b16 %v249, %v248
    %v277 = vpack.c.b16 %v251, %v250
    %v278 = vpack.c.b16 %v253, %v252
    %v279 = vpack.c.b16 %v255, %v254
    %v280 = vpack.c.b16 %v257, %v256
    %v281 = vpack.c.b16 %v259, %v258
    %v282 = vpack.c.b16 %v261, %v260
    %v283 = vpack.c.b16 %v263, %v262
    %v284 = vpack.c.b16 %v265, %v264
    %v285 = vpack.c.b16 %v267, %v266
    %v286 = vpack.c.b16 %v269, %v268
    %v287 = vpack.c.b16 %v271, %v270
    %304 = vmatprep.subr.bf16.mxu0 0
    %305 = vmatpush1.bf16.msra.mxu0 %v272
    %306 = vmatprep.subr.bf16.mxu0 0
    %307 = vmatpush1.bf16.msra.mxu0 %v273
    %308 = vmatprep.subr.bf16.mxu0 0
    %309 = vmatpush1.bf16.msra.mxu0 %v274
    %310 = vmatprep.subr.bf16.mxu0 0
    %311 = vmatpush1.bf16.msra.mxu0 %v275
    %312 = vmatprep.subr.bf16.mxu0 0
    %313 = vmatpush1.bf16.msra.mxu0 %v276
    %314 = vmatprep.subr.bf16.mxu0 0
    %315 = vmatpush1.bf16.msra.mxu0 %v277
    %316 = vmatprep.subr.bf16.mxu0 0
    %317 = vmatpush1.bf16.msra.mxu0 %v278
    %318 = vmatprep.subr.bf16.mxu0 0
    %319 = vmatpush1.bf16.msra.mxu0 %v279
    %320 = vmatprep.subr.bf16.mxu0 0
    %321 = vmatpush1.bf16.msra.mxu0 %v280
    %322 = vmatprep.subr.bf16.mxu0 0
    %323 = vmatpush1.bf16.msra.mxu0 %v281
    %324 = vmatprep.subr.bf16.mxu0 0
    %325 = vmatpush1.bf16.msra.mxu0 %v282
    %326 = vmatprep.subr.bf16.mxu0 0
    %327 = vmatpush1.bf16.msra.mxu0 %v283
    %328 = vmatprep.subr.bf16.mxu0 0
    %329 = vmatpush1.bf16.msra.mxu0 %v284
    %330 = vmatprep.subr.bf16.mxu0 0
    %331 = vmatpush1.bf16.msra.mxu0 %v285
    %332 = vmatprep.subr.bf16.mxu0 0
    %333 = vmatpush1.bf16.msra.mxu0 %v286
    %334 = vmatprep.subr.bf16.mxu0 0
    %335 = vmatpush1.bf16.msra.mxu0 %v287
    %336 = vmatprep.mubr.bf16.mxu0 %v207
    %337 = vmatmul.mubr.bf16.gmra.mrb[0].mxu0 %v206
    %v338 = vpop.f32.mrb[0].mxu0
    %v339 = vadd.f32 0.0, %v338
    %v340 = vpop.f32.mrb[0].mxu0
    %v341 = vpop.f32.mrb[0].mxu0
    %v342 = vpop.f32.mrb[0].mxu0
    %343 = vdwg.mxu0
    %v344 = vmul.f32 %v339, 0.00390625
    %v345 = vmul.f32 %v344, %v344
    %v347 = vrot.slane %v345, 7
    %v349 = vsub.f32 %v344, %v347
    %v350 = vmax.f32 %v349, 0.0
    %v351 = vadd.f32 %v350, 1e-05
    %v352 = vrsqrt.pop %v351
    %v354 = vrot.slane %v352, 1
    %v356 = vmul.f32 %v133, %v354
    %v357 = vmul.f32 %v344, %v356
    %v359 = vrot.slane %v357, 7
    %v361 = vsub.f32 %v133, %v359
    %v362 = vlaneseq
    %v363 = vshrl.u32 %v362, 7
    %v364 = vsub.s32 0, %v363
    %v365 = vrot.slane %v356, %v364
    %v366 = vmul.f32 %v71, %v365
    %v367 = vlaneseq
    %v368 = vshrl.u32 %v367, 7
    %v369 = vsub.s32 1, %v368
    %v370 = vrot.slane %v361, %v369
    %v371 = vmul.f32 %v72, %v370
    %v372 = vadd.f32 %v366, %v371
    %v373 = vpack.c.bf16 %v372, %v372
    %v376 = vunpack.c.l.b16 %v166
    %v377 = vunpack.c.h.b16 %v166
    %v378 = vunpack.c.l.b16 %v167
    %v379 = vunpack.c.h.b16 %v167
    %v380 = vpack.c.b16 %v378, %v376
    %v381 = vpack.c.b16 %v379, %v377
    %v385 = vsel %vm86, %v373, 0
    %387 = vmatprep.subr.bf16.mxu0 %v381
    %388 = vmatpush1.bf16.msra.mxu0 %v380
    %389 = vmatprep.subr.bf16.mxu0 0
    %390 = vmatpush1.bf16.msra.mxu0 0
    %391 = vmatprep.subr.bf16.mxu0 0
    %392 = vmatpush1.bf16.msra.mxu0 0
    %393 = vmatprep.subr.bf16.mxu0 0
    %394 = vmatpush1.bf16.msra.mxu0 0
    %395 = vmatprep.subr.bf16.mxu0 0
    %396 = vmatpush1.bf16.msra.mxu0 0
    %397 = vmatprep.subr.bf16.mxu0 0
    %398 = vmatpush1.bf16.msra.mxu0 0
    %399 = vmatprep.subr.bf16.mxu0 0
    %400 = vmatpush1.bf16.msra.mxu0 0
    %401 = vmatprep.subr.bf16.mxu0 0
    %402 = vmatpush1.bf16.msra.mxu0 0
    %403 = vmatprep.subr.bf16.mxu0 0
    %404 = vmatpush1.bf16.msra.mxu0 0
    %405 = vmatprep.subr.bf16.mxu0 0
    %406 = vmatpush1.bf16.msra.mxu0 0
    %407 = vmatprep.subr.bf16.mxu0 0
    %408 = vmatpush1.bf16.msra.mxu0 0
    %409 = vmatprep.subr.bf16.mxu0 0
    %410 = vmatpush1.bf16.msra.mxu0 0
    %411 = vmatprep.subr.bf16.mxu0 0
    %412 = vmatpush1.bf16.msra.mxu0 0
    %413 = vmatprep.subr.bf16.mxu0 0
    %414 = vmatpush1.bf16.msra.mxu0 0
    %415 = vmatprep.subr.bf16.mxu0 0
    %416 = vmatpush1.bf16.msra.mxu0 0
    %417 = vmatprep.subr.bf16.mxu0 0
    %418 = vmatpush1.bf16.msra.mxu0 0
    %419 = vmatprep.mubr.bf16.mxu0 0
    %420 = vmatmul.mubr.bf16.gmra.mrb[0].mxu0 %v385
    %v421 = vpop.f32.mrb[0].mxu0
    %v422 = vadd.f32 0.0, %v421
    %v423 = vpop.f32.mrb[0].mxu0
    %v424 = vadd.f32 0.0, %v423
    %v425 = vpop.f32.mrb[0].mxu0
    %v426 = vpop.f32.mrb[0].mxu0
    %427 = vdwg.mxu0
    %v428 = vlaneseq
    %v429 = vshrl.u32 %v428, 7
    %v430 = vsub.s32 0, %v429
    %v431 = vrot.slane %v422, %v430
    %v432 = vlaneseq
    %v433 = vshrl.u32 %v432, 7
    %v434 = vsub.s32 0, %v433
    %v435 = vrot.slane %v424, %v434
    %v436 = vmul.f32 %v125, %v431
    %v437 = vmul.f32 %v127, %v435
    %v438 = vmul.f32 %v129, %v431
    %v439 = vmul.f32 %v131, %v435
    %v440 = vlaneseq
    %v441 = vshrl.u32 %v440, 7
    %v442 = vsub.s32 1, %v441
    %v443 = vrot.slane %v422, %v442
    %v444 = vlaneseq
    %v445 = vshrl.u32 %v444, 7
    %v446 = vsub.s32 1, %v445
    %v447 = vrot.slane %v424, %v446
    %v448 = vadd.f32 %v436, %v443
    %v449 = vadd.f32 %v437, %v447
    %v450 = vadd.f32 %v438, %v443
    %v451 = vadd.f32 %v439, %v447
    %v452 = vmax.f32 %v448, 0.0
    %v453 = vmax.f32 %v449, 0.0
    %v454 = vmax.f32 %v450, 0.0
    %v455 = vmax.f32 %v451, 0.0
    %v456 = vld [vmem:[#allocation2] sm:$0xff]
    %v457 = vld [vmem:[#allocation2 + $0x8] sm:$0xff]
    %v458 = vld [vmem:[#allocation2 + $0x10] sm:$0xff]
    %v459 = vld [vmem:[#allocation2 + $0x18] sm:$0xff]
    %v460 = vld [vmem:[#allocation2 + $0x20] sm:$0xff]
    %v461 = vld [vmem:[#allocation2 + $0x28] sm:$0xff]
    %v462 = vld [vmem:[#allocation2 + $0x30] sm:$0xff]
    %v463 = vld [vmem:[#allocation2 + $0x38] sm:$0xff]
    %v464 = vld [vmem:[#allocation2 + $0x40] sm:$0xff]
    %v465 = vld [vmem:[#allocation2 + $0x48] sm:$0xff]
    %v466 = vld [vmem:[#allocation2 + $0x50] sm:$0xff]
    %v467 = vld [vmem:[#allocation2 + $0x58] sm:$0xff]
    %v468 = vld [vmem:[#allocation2 + $0x60] sm:$0xff]
    %v469 = vld [vmem:[#allocation2 + $0x68] sm:$0xff]
    %v470 = vld [vmem:[#allocation2 + $0x70] sm:$0xff]
    %v471 = vld [vmem:[#allocation2 + $0x78] sm:$0xff]
    %v472 = vld [vmem:[#allocation2 + $0x80] sm:$0xff]
    %v473 = vld [vmem:[#allocation2 + $0x88] sm:$0xff]
    %v474 = vld [vmem:[#allocation2 + $0x90] sm:$0xff]
    %v475 = vld [vmem:[#allocation2 + $0x98] sm:$0xff]
    %v476 = vld [vmem:[#allocation2 + $0xa0] sm:$0xff]
    %v477 = vld [vmem:[#allocation2 + $0xa8] sm:$0xff]
    %v478 = vld [vmem:[#allocation2 + $0xb0] sm:$0xff]
    %v479 = vld [vmem:[#allocation2 + $0xb8] sm:$0xff]
    %v480 = vld [vmem:[#allocation2 + $0xc0] sm:$0xff]
    %v481 = vld [vmem:[#allocation2 + $0xc8] sm:$0xff]
    %v482 = vld [vmem:[#allocation2 + $0xd0] sm:$0xff]
    %v483 = vld [vmem:[#allocation2 + $0xd8] sm:$0xff]
    %v484 = vld [vmem:[#allocation2 + $0xe0] sm:$0xff]
    %v485 = vld [vmem:[#allocation2 + $0xe8] sm:$0xff]
    %v486 = vld [vmem:[#allocation2 + $0xf0] sm:$0xff]
    %v487 = vld [vmem:[#allocation2 + $0xf8] sm:$0xff]
    %v488 = vld [vmem:[#allocation2 + $0x100] sm:$0xff]
    %v489 = vld [vmem:[#allocation2 + $0x108] sm:$0xff]
    %v490 = vld [vmem:[#allocation2 + $0x110] sm:$0xff]
    %v491 = vld [vmem:[#allocation2 + $0x118] sm:$0xff]
    %v492 = vld [vmem:[#allocation2 + $0x120] sm:$0xff]
    %v493 = vld [vmem:[#allocation2 + $0x128] sm:$0xff]
    %v494 = vld [vmem:[#allocation2 + $0x130] sm:$0xff]
    %v495 = vld [vmem:[#allocation2 + $0x138] sm:$0xff]
    %v496 = vld [vmem:[#allocation2 + $0x140] sm:$0xff]
    %v497 = vld [vmem:[#allocation2 + $0x148] sm:$0xff]
    %v498 = vld [vmem:[#allocation2 + $0x150] sm:$0xff]
    %v499 = vld [vmem:[#allocation2 + $0x158] sm:$0xff]
    %v500 = vld [vmem:[#allocation2 + $0x160] sm:$0xff]
    %v501 = vld [vmem:[#allocation2 + $0x168] sm:$0xff]
    %v502 = vld [vmem:[#allocation2 + $0x170] sm:$0xff]
    %v503 = vld [vmem:[#allocation2 + $0x178] sm:$0xff]
    %v504 = vld [vmem:[#allocation2 + $0x180] sm:$0xff]
    %v505 = vld [vmem:[#allocation2 + $0x188] sm:$0xff]
    %v506 = vld [vmem:[#allocation2 + $0x190] sm:$0xff]
    %v507 = vld [vmem:[#allocation2 + $0x198] sm:$0xff]
    %v508 = vld [vmem:[#allocation2 + $0x1a0] sm:$0xff]
    %v509 = vld [vmem:[#allocation2 + $0x1a8] sm:$0xff]
    %v510 = vld [vmem:[#allocation2 + $0x1b0] sm:$0xff]
    %v511 = vld [vmem:[#allocation2 + $0x1b8] sm:$0xff]
    %v512 = vld [vmem:[#allocation2 + $0x1c0] sm:$0xff]
    %v513 = vld [vmem:[#allocation2 + $0x1c8] sm:$0xff]
    %v514 = vld [vmem:[#allocation2 + $0x1d0] sm:$0xff]
    %v515 = vld [vmem:[#allocation2 + $0x1d8] sm:$0xff]
    %v516 = vld [vmem:[#allocation2 + $0x1e0] sm:$0xff]
    %v517 = vld [vmem:[#allocation2 + $0x1e8] sm:$0xff]
    %v518 = vld [vmem:[#allocation2 + $0x1f0] sm:$0xff]
    %v519 = vld [vmem:[#allocation2 + $0x1f8] sm:$0xff]
    %v520 = vpack.c.bf16 %v454, %v452
    %v521 = vpack.c.bf16 %v455, %v453
    %v586 = vunpack.c.l.b16 %v456
    %v587 = vunpack.c.h.b16 %v456
    %v588 = vunpack.c.l.b16 %v457
    %v589 = vunpack.c.h.b16 %v457
    %v590 = vunpack.c.l.b16 %v458
    %v591 = vunpack.c.h.b16 %v458
    %v592 = vunpack.c.l.b16 %v459
    %v593 = vunpack.c.h.b16 %v459
    %v594 = vunpack.c.l.b16 %v460
    %v595 = vunpack.c.h.b16 %v460
    %v596 = vunpack.c.l.b16 %v461
    %v597 = vunpack.c.h.b16 %v461
    %v598 = vunpack.c.l.b16 %v462
    %v599 = vunpack.c.h.b16 %v462
    %v600 = vunpack.c.l.b16 %v463
    %v601 = vunpack.c.h.b16 %v463
    %v602 = vunpack.c.l.b16 %v464
    %v603 = vunpack.c.h.b16 %v464
    %v604 = vunpack.c.l.b16 %v465
    %v605 = vunpack.c.h.b16 %v465
    %v606 = vunpack.c.l.b16 %v466
    %v607 = vunpack.c.h.b16 %v466
    %v608 = vunpack.c.l.b16 %v467
    %v609 = vunpack.c.h.b16 %v467
    %v610 = vunpack.c.l.b16 %v468
    %v611 = vunpack.c.h.b16 %v468
    %v612 = vunpack.c.l.b16 %v469
    %v613 = vunpack.c.h.b16 %v469
    %v614 = vunpack.c.l.b16 %v470
    %v615 = vunpack.c.h.b16 %v470
    %v616 = vunpack.c.l.b16 %v471
    %v617 = vunpack.c.h.b16 %v471
    %v618 = vunpack.c.l.b16 %v472
    %v619 = vunpack.c.h.b16 %v472
    %v620 = vunpack.c.l.b16 %v473
    %v621 = vunpack.c.h.b16 %v473
    %v622 = vunpack.c.l.b16 %v474
    %v623 = vunpack.c.h.b16 %v474
    %v624 = vunpack.c.l.b16 %v475
    %v625 = vunpack.c.h.b16 %v475
    %v626 = vunpack.c.l.b16 %v476
    %v627 = vunpack.c.h.b16 %v476
    %v628 = vunpack.c.l.b16 %v477
    %v629 = vunpack.c.h.b16 %v477
    %v630 = vunpack.c.l.b16 %v478
    %v631 = vunpack.c.h.b16 %v478
    %v632 = vunpack.c.l.b16 %v479
    %v633 = vunpack.c.h.b16 %v479
    %v634 = vunpack.c.l.b16 %v480
    %v635 = vunpack.c.h.b16 %v480
    %v636 = vunpack.c.l.b16 %v481
    %v637 = vunpack.c.h.b16 %v481
    %v638 = vunpack.c.l.b16 %v482
    %v639 = vunpack.c.h.b16 %v482
    %v640 = vunpack.c.l.b16 %v483
    %v641 = vunpack.c.h.b16 %v483
    %v642 = vunpack.c.l.b16 %v484
    %v643 = vunpack.c.h.b16 %v484
    %v644 = vunpack.c.l.b16 %v485
    %v645 = vunpack.c.h.b16 %v485
    %v646 = vunpack.c.l.b16 %v486
    %v647 = vunpack.c.h.b16 %v486
    %v648 = vunpack.c.l.b16 %v487
    %v649 = vunpack.c.h.b16 %v487
    %v650 = vunpack.c.l.b16 %v488
    %v651 = vunpack.c.h.b16 %v488
    %v652 = vunpack.c.l.b16 %v489
    %v653 = vunpack.c.h.b16 %v489
    %v654 = vunpack.c.l.b16 %v490
    %v655 = vunpack.c.h.b16 %v490
    %v656 = vunpack.c.l.b16 %v491
    %v657 = vunpack.c.h.b16 %v491
    %v658 = vunpack.c.l.b16 %v492
    %v659 = vunpack.c.h.b16 %v492
    %v660 = vunpack.c.l.b16 %v493
    %v661 = vunpack.c.h.b16 %v493
    %v662 = vunpack.c.l.b16 %v494
    %v663 = vunpack.c.h.b16 %v494
    %v664 = vunpack.c.l.b16 %v495
    %v665 = vunpack.c.h.b16 %v495
    %v666 = vunpack.c.l.b16 %v496
    %v667 = vunpack.c.h.b16 %v496
    %v668 = vunpack.c.l.b16 %v497
    %v669 = vunpack.c.h.b16 %v497
    %v670 = vunpack.c.l.b16 %v498
    %v671 = vunpack.c.h.b16 %v498
    %v672 = vunpack.c.l.b16 %v499
    %v673 = vunpack.c.h.b16 %v499
    %v674 = vunpack.c.l.b16 %v500
    %v675 = vunpack.c.h.b16 %v500
    %v676 = vunpack.c.l.b16 %v501
    %v677 = vunpack.c.h.b16 %v501
    %v678 = vunpack.c.l.b16 %v502
    %v679 = vunpack.c.h.b16 %v502
    %v680 = vunpack.c.l.b16 %v503
    %v681 = vunpack.c.h.b16 %v503
    %v682 = vunpack.c.l.b16 %v504
    %v683 = vunpack.c.h.b16 %v504
    %v684 = vunpack.c.l.b16 %v505
    %v685 = vunpack.c.h.b16 %v505
    %v686 = vunpack.c.l.b16 %v506
    %v687 = vunpack.c.h.b16 %v506
    %v688 = vunpack.c.l.b16 %v507
    %v689 = vunpack.c.h.b16 %v507
    %v690 = vunpack.c.l.b16 %v508
    %v691 = vunpack.c.h.b16 %v508
    %v692 = vunpack.c.l.b16 %v509
    %v693 = vunpack.c.h.b16 %v509
    %v694 = vunpack.c.l.b16 %v510
    %v695 = vunpack.c.h.b16 %v510
    %v696 = vunpack.c.l.b16 %v511
    %v697 = vunpack.c.h.b16 %v511
    %v698 = vunpack.c.l.b16 %v512
    %v699 = vunpack.c.h.b16 %v512
    %v700 = vunpack.c.l.b16 %v513
    %v701 = vunpack.c.h.b16 %v513
    %v702 = vunpack.c.l.b16 %v514
    %v703 = vunpack.c.h.b16 %v514
    %v704 = vunpack.c.l.b16 %v515
    %v705 = vunpack.c.h.b16 %v515
    %v706 = vunpack.c.l.b16 %v516
    %v707 = vunpack.c.h.b16 %v516
    %v708 = vunpack.c.l.b16 %v517
    %v709 = vunpack.c.h.b16 %v517
    %v710 = vunpack.c.l.b16 %v518
    %v711 = vunpack.c.h.b16 %v518
    %v712 = vunpack.c.l.b16 %v519
    %v713 = vunpack.c.h.b16 %v519
    %v714 = vpack.c.b16 %v590, %v586
    %v715 = vpack.c.b16 %v591, %v587
    %v716 = vpack.c.b16 %v592, %v588
    %v717 = vpack.c.b16 %v593, %v589
    %v718 = vpack.c.b16 %v598, %v594
    %v719 = vpack.c.b16 %v599, %v595
    %v720 = vpack.c.b16 %v600, %v596
    %v721 = vpack.c.b16 %v601, %v597
    %v722 = vpack.c.b16 %v606, %v602
    %v723 = vpack.c.b16 %v607, %v603
    %v724 = vpack.c.b16 %v608, %v604
    %v725 = vpack.c.b16 %v609, %v605
    %v726 = vpack.c.b16 %v614, %v610
    %v727 = vpack.c.b16 %v615, %v611
    %v728 = vpack.c.b16 %v616, %v612
    %v729 = vpack.c.b16 %v617, %v613
    %v730 = vpack.c.b16 %v622, %v618
    %v731 = vpack.c.b16 %v623, %v619
    %v732 = vpack.c.b16 %v624, %v620
    %v733 = vpack.c.b16 %v625, %v621
    %v734 = vpack.c.b16 %v630, %v626
    %v735 = vpack.c.b16 %v631, %v627
    %v736 = vpack.c.b16 %v632, %v628
    %v737 = vpack.c.b16 %v633, %v629
    %v738 = vpack.c.b16 %v638, %v634
    %v739 = vpack.c.b16 %v639, %v635
    %v740 = vpack.c.b16 %v640, %v636
    %v741 = vpack.c.b16 %v641, %v637
    %v742 = vpack.c.b16 %v646, %v642
    %v743 = vpack.c.b16 %v647, %v643
    %v744 = vpack.c.b16 %v648, %v644
    %v745 = vpack.c.b16 %v649, %v645
    %v746 = vpack.c.b16 %v654, %v650
    %v747 = vpack.c.b16 %v655, %v651
    %v748 = vpack.c.b16 %v656, %v652
    %v749 = vpack.c.b16 %v657, %v653
    %v750 = vpack.c.b16 %v662, %v658
    %v751 = vpack.c.b16 %v663, %v659
    %v752 = vpack.c.b16 %v664, %v660
    %v753 = vpack.c.b16 %v665, %v661
    %v754 = vpack.c.b16 %v670, %v666
    %v755 = vpack.c.b16 %v671, %v667
    %v756 = vpack.c.b16 %v672, %v668
    %v757 = vpack.c.b16 %v673, %v669
    %v758 = vpack.c.b16 %v678, %v674
    %v759 = vpack.c.b16 %v679, %v675
    %v760 = vpack.c.b16 %v680, %v676
    %v761 = vpack.c.b16 %v681, %v677
    %v762 = vpack.c.b16 %v686, %v682
    %v763 = vpack.c.b16 %v687, %v683
    %v764 = vpack.c.b16 %v688, %v684
    %v765 = vpack.c.b16 %v689, %v685
    %v766 = vpack.c.b16 %v694, %v690
    %v767 = vpack.c.b16 %v695, %v691
    %v768 = vpack.c.b16 %v696, %v692
    %v769 = vpack.c.b16 %v697, %v693
    %v770 = vpack.c.b16 %v702, %v698
    %v771 = vpack.c.b16 %v703, %v699
    %v772 = vpack.c.b16 %v704, %v700
    %v773 = vpack.c.b16 %v705, %v701
    %v774 = vpack.c.b16 %v710, %v706
    %v775 = vpack.c.b16 %v711, %v707
    %v776 = vpack.c.b16 %v712, %v708
    %v777 = vpack.c.b16 %v713, %v709
    %842 = vmatprep.subr.bf16.mxu0 %v715
    %843 = vmatpush1.bf16.msra.mxu0 %v714
    %844 = vmatprep.subr.bf16.mxu0 %v719
    %845 = vmatpush1.bf16.msra.mxu0 %v718
    %846 = vmatprep.subr.bf16.mxu0 %v723
    %847 = vmatpush1.bf16.msra.mxu0 %v722
    %848 = vmatprep.subr.bf16.mxu0 %v727
    %849 = vmatpush1.bf16.msra.mxu0 %v726
    %850 = vmatprep.subr.bf16.mxu0 %v731
    %851 = vmatpush1.bf16.msra.mxu0 %v730
    %852 = vmatprep.subr.bf16.mxu0 %v735
    %853 = vmatpush1.bf16.msra.mxu0 %v734
    %854 = vmatprep.subr.bf16.mxu0 %v739
    %855 = vmatpush1.bf16.msra.mxu0 %v738
    %856 = vmatprep.subr.bf16.mxu0 %v743
    %857 = vmatpush1.bf16.msra.mxu0 %v742
    %858 = vmatprep.subr.bf16.mxu0 %v747
    %859 = vmatpush1.bf16.msra.mxu0 %v746
    %860 = vmatprep.subr.bf16.mxu0 %v751
    %861 = vmatpush1.bf16.msra.mxu0 %v750
    %862 = vmatprep.subr.bf16.mxu0 %v755
    %863 = vmatpush1.bf16.msra.mxu0 %v754
    %864 = vmatprep.subr.bf16.mxu0 %v759
    %865 = vmatpush1.bf16.msra.mxu0 %v758
    %866 = vmatprep.subr.bf16.mxu0 %v763
    %867 = vmatpush1.bf16.msra.mxu0 %v762
    %868 = vmatprep.subr.bf16.mxu0 %v767
    %869 = vmatpush1.bf16.msra.mxu0 %v766
    %870 = vmatprep.subr.bf16.mxu0 %v771
    %871 = vmatpush1.bf16.msra.mxu0 %v770
    %872 = vmatprep.subr.bf16.mxu0 %v775
    %873 = vmatpush1.bf16.msra.mxu0 %v774
    %874 = vmatprep.mubr.bf16.mxu0 %v521
    %875 = vmatmul.mubr.bf16.gmra.mrb[0].mxu0 %v520
    %v876 = vpop.f32.mrb[0].mxu0
    %v877 = vadd.f32 0.0, %v876
    %v878 = vpop.f32.mrb[0].mxu0
    %v879 = vadd.f32 0.0, %v878
    %v880 = vpop.f32.mrb[0].mxu0
    %v881 = vadd.f32 0.0, %v880
    %v882 = vpop.f32.mrb[0].mxu0
    %v883 = vadd.f32 0.0, %v882
    %884 = vdwg.mxu0
    %885 = vmatprep.subr.bf16.mxu0 %v717
    %886 = vmatpush1.bf16.msra.mxu0 %v716
    %887 = vmatprep.subr.bf16.mxu0 %v721
    %888 = vmatpush1.bf16.msra.mxu0 %v720
    %889 = vmatprep.subr.bf16.mxu0 %v725
    %890 = vmatpush1.bf16.msra.mxu0 %v724
    %891 = vmatprep.subr.bf16.mxu0 %v729
    %892 = vmatpush1.bf16.msra.mxu0 %v728
    %893 = vmatprep.subr.bf16.mxu0 %v733
    %894 = vmatpush1.bf16.msra.mxu0 %v732
    %895 = vmatprep.subr.bf16.mxu0 %v737
    %896 = vmatpush1.bf16.msra.mxu0 %v736
    %897 = vmatprep.subr.bf16.mxu0 %v741
    %898 = vmatpush1.bf16.msra.mxu0 %v740
    %899 = vmatprep.subr.bf16.mxu0 %v745
    %900 = vmatpush1.bf16.msra.mxu0 %v744
    %901 = vmatprep.subr.bf16.mxu0 %v749
    %902 = vmatpush1.bf16.msra.mxu0 %v748
    %903 = vmatprep.subr.bf16.mxu0 %v753
    %904 = vmatpush1.bf16.msra.mxu0 %v752
    %905 = vmatprep.subr.bf16.mxu0 %v757
    %906 = vmatpush1.bf16.msra.mxu0 %v756
    %907 = vmatprep.subr.bf16.mxu0 %v761
    %908 = vmatpush1.bf16.msra.mxu0 %v760
    %909 = vmatprep.subr.bf16.mxu0 %v765
    %910 = vmatpush1.bf16.msra.mxu0 %v764
    %911 = vmatprep.subr.bf16.mxu0 %v769
    %912 = vmatpush1.bf16.msra.mxu0 %v768
    %913 = vmatprep.subr.bf16.mxu0 %v773
    %914 = vmatpush1.bf16.msra.mxu0 %v772
    %915 = vmatprep.subr.bf16.mxu0 %v777
    %916 = vmatpush1.bf16.msra.mxu0 %v776
    %917 = vmatprep.mubr.bf16.mxu0 %v521
    %918 = vmatmul.mubr.bf16.gmra.mrb[0].mxu0 %v520
    %v919 = vpop.f32.mrb[0].mxu0
    %v920 = vadd.f32 0.0, %v919
    %v921 = vpop.f32.mrb[0].mxu0
    %v922 = vadd.f32 0.0, %v921
    %v923 = vpop.f32.mrb[0].mxu0
    %v924 = vadd.f32 0.0, %v923
    %v925 = vpop.f32.mrb[0].mxu0
    %v926 = vadd.f32 0.0, %v925
    %927 = vdwg.mxu0
    %v928 = vld [vmem:[%s6] sm:$0x3]
    %v929 = vld [vmem:[%s7] sm:$0xf]
    %v930 = vld [vmem:[%s7 + $0x4] sm:$0xf]
    %v931 = vld [vmem:[%s7 + $0x8] sm:$0xf]
    %v932 = vld [vmem:[%s7 + $0xc] sm:$0xf]
    %v933 = vld [vmem:[%s7 + $0x10] sm:$0xf]
    %v934 = vld [vmem:[%s7 + $0x14] sm:$0xf]
    %v935 = vld [vmem:[%s7 + $0x18] sm:$0xf]
    %v936 = vld [vmem:[%s7 + $0x1c] sm:$0xf]
    %v937 = vld [vmem:[%s7 + $0x20] sm:$0xf]
    %v938 = vld [vmem:[%s7 + $0x24] sm:$0xf]
    %v939 = vld [vmem:[%s7 + $0x28] sm:$0xf]
    %v940 = vld [vmem:[%s7 + $0x2c] sm:$0xf]
    %v941 = vld [vmem:[%s7 + $0x30] sm:$0xf]
    %v942 = vld [vmem:[%s7 + $0x34] sm:$0xf]
    %v943 = vld [vmem:[%s7 + $0x38] sm:$0xf]
    %v944 = vld [vmem:[%s7 + $0x3c] sm:$0xf]
    %v945 = vld [vmem:[%s7 + $0x40] sm:$0xf]
    %v946 = vld [vmem:[%s7 + $0x44] sm:$0xf]
    %v947 = vld [vmem:[%s7 + $0x48] sm:$0xf]
    %v948 = vld [vmem:[%s7 + $0x4c] sm:$0xf]
    %v949 = vld [vmem:[%s7 + $0x50] sm:$0xf]
    %v950 = vld [vmem:[%s7 + $0x54] sm:$0xf]
    %v951 = vld [vmem:[%s7 + $0x58] sm:$0xf]
    %v952 = vld [vmem:[%s7 + $0x5c] sm:$0xf]
    %v953 = vld [vmem:[%s7 + $0x60] sm:$0xf]
    %v954 = vld [vmem:[%s7 + $0x64] sm:$0xf]
    %v955 = vld [vmem:[%s7 + $0x68] sm:$0xf]
    %v956 = vld [vmem:[%s7 + $0x6c] sm:$0xf]
    %v957 = vld [vmem:[%s7 + $0x70] sm:$0xf]
    %v958 = vld [vmem:[%s7 + $0x74] sm:$0xf]
    %v959 = vld [vmem:[%s7 + $0x78] sm:$0xf]
    %v960 = vld [vmem:[%s7 + $0x7c] sm:$0xf]
    %v961 = vld [vmem:[%s7 + $0x80] sm:$0xf]
    %v962 = vld [vmem:[%s7 + $0x84] sm:$0xf]
    %v963 = vld [vmem:[%s7 + $0x88] sm:$0xf]
    %v964 = vld [vmem:[%s7 + $0x8c] sm:$0xf]
    %v965 = vld [vmem:[%s7 + $0x90] sm:$0xf]
    %v966 = vld [vmem:[%s7 + $0x94] sm:$0xf]
    %v967 = vld [vmem:[%s7 + $0x98] sm:$0xf]
    %v968 = vld [vmem:[%s7 + $0x9c] sm:$0xf]
    %v969 = vld [vmem:[%s7 + $0xa0] sm:$0xf]
    %v970 = vld [vmem:[%s7 + $0xa4] sm:$0xf]
    %v971 = vld [vmem:[%s7 + $0xa8] sm:$0xf]
    %v972 = vld [vmem:[%s7 + $0xac] sm:$0xf]
    %v973 = vld [vmem:[%s7 + $0xb0] sm:$0xf]
    %v974 = vld [vmem:[%s7 + $0xb4] sm:$0xf]
    %v975 = vld [vmem:[%s7 + $0xb8] sm:$0xf]
    %v976 = vld [vmem:[%s7 + $0xbc] sm:$0xf]
    %v977 = vld [vmem:[%s7 + $0xc0] sm:$0xf]
    %v978 = vld [vmem:[%s7 + $0xc4] sm:$0xf]
    %v979 = vld [vmem:[%s7 + $0xc8] sm:$0xf]
    %v980 = vld [vmem:[%s7 + $0xcc] sm:$0xf]
    %v981 = vld [vmem:[%s7 + $0xd0] sm:$0xf]
    %v982 = vld [vmem:[%s7 + $0xd4] sm:$0xf]
    %v983 = vld [vmem:[%s7 + $0xd8] sm:$0xf]
    %v984 = vld [vmem:[%s7 + $0xdc] sm:$0xf]
    %v985 = vld [vmem:[%s7 + $0xe0] sm:$0xf]
    %v986 = vld [vmem:[%s7 + $0xe4] sm:$0xf]
    %v987 = vld [vmem:[%s7 + $0xe8] sm:$0xf]
    %v988 = vld [vmem:[%s7 + $0xec] sm:$0xf]
    %v989 = vld [vmem:[%s7 + $0xf0] sm:$0xf]
    %v990 = vld [vmem:[%s7 + $0xf4] sm:$0xf]
    %v991 = vld [vmem:[%s7 + $0xf8] sm:$0xf]
    %v992 = vld [vmem:[%s7 + $0xfc] sm:$0xf]
    %v993 = vld [vmem:[%s8] sm:$0xff]
    %v994 = vld [vmem:[%s8 + $0x8] sm:$0xff]
    %v995 = vadd.f32 %v877, %v881
    %v996 = vrot.slane %v995, 4
    %v997 = vadd.f32 %v995, %v996
    %v998 = vrot.slane %v997, 2
    %v999 = vadd.f32 %v997, %v998
    %v1000 = vrot.slane %v999, 1
    %v1001 = vadd.f32 %v999, %v1000
    %v1002 = vadd.f32 %v879, %v883
    %v1003 = vrot.slane %v1002, 4
    %v1004 = vadd.f32 %v1002, %v1003
    %v1005 = vrot.slane %v1004, 2
    %v1006 = vadd.f32 %v1004, %v1005
    %v1007 = vrot.slane %v1006, 1
    %v1008 = vadd.f32 %v1006, %v1007
    %v1009 = vadd.f32 %v920, %v924
    %v1010 = vrot.slane %v1009, 4
    %v1011 = vadd.f32 %v1009, %v1010
    %v1012 = vrot.slane %v1011, 2
    %v1013 = vadd.f32 %v1011, %v1012
    %v1014 = vrot.slane %v1013, 1
    %v1015 = vadd.f32 %v1013, %v1014
    %v1016 = vadd.f32 %v922, %v926
    %v1017 = vrot.slane %v1016, 4
    %v1018 = vadd.f32 %v1016, %v1017
    %v1019 = vrot.slane %v1018, 2
    %v1020 = vadd.f32 %v1018, %v1019
    %v1021 = vrot.slane %v1020, 1
    %v1022 = vadd.f32 %v1020, %v1021
    %v1023 = vmul.f32 %v877, %v877
    %v1024 = vmul.f32 %v879, %v879
    %v1025 = vmul.f32 %v920, %v920
    %v1026 = vmul.f32 %v922, %v922
    %v1027 = vmul.f32 %v881, %v881
    %v1028 = vmul.f32 %v883, %v883
    %v1029 = vmul.f32 %v924, %v924
    %v1030 = vmul.f32 %v926, %v926
    %v1031 = vadd.f32 %v1023, %v1027
    %v1032 = vrot.slane %v1031, 4
    %v1033 = vadd.f32 %v1031, %v1032
    %v1034 = vrot.slane %v1033, 2
    %v1035 = vadd.f32 %v1033, %v1034
    %v1036 = vrot.slane %v1035, 1
    %v1037 = vadd.f32 %v1035, %v1036
    %v1038 = vadd.f32 %v1024, %v1028
    %v1039 = vrot.slane %v1038, 4
    %v1040 = vadd.f32 %v1038, %v1039
    %v1041 = vrot.slane %v1040, 2
    %v1042 = vadd.f32 %v1040, %v1041
    %v1043 = vrot.slane %v1042, 1
    %v1044 = vadd.f32 %v1042, %v1043
    %v1045 = vadd.f32 %v1025, %v1029
    %v1046 = vrot.slane %v1045, 4
    %v1047 = vadd.f32 %v1045, %v1046
    %v1048 = vrot.slane %v1047, 2
    %v1049 = vadd.f32 %v1047, %v1048
    %v1050 = vrot.slane %v1049, 1
    %v1051 = vadd.f32 %v1049, %v1050
    %v1052 = vadd.f32 %v1026, %v1030
    %v1053 = vrot.slane %v1052, 4
    %v1054 = vadd.f32 %v1052, %v1053
    %v1055 = vrot.slane %v1054, 2
    %v1056 = vadd.f32 %v1054, %v1055
    %v1057 = vrot.slane %v1056, 1
    %v1058 = vadd.f32 %v1056, %v1057
    %v1059 = vmul.f32 %v71, %v1001
    %v1060 = vmul.f32 %v71, %v1008
    %v1061 = vmul.f32 %v71, %v1015
    %v1062 = vmul.f32 %v71, %v1022
    %v1063 = vmul.f32 %v72, %v1037
    %v1064 = vmul.f32 %v72, %v1044
    %v1065 = vmul.f32 %v72, %v1051
    %v1066 = vmul.f32 %v72, %v1058
    %v1067 = vadd.f32 %v1059, %v1063
    %v1068 = vadd.f32 %v1060, %v1064
    %v1069 = vadd.f32 %v1061, %v1065
    %v1070 = vadd.f32 %v1062, %v1066
    %v1071 = vpack.c.bf16 %v1067, %v1067
    %v1072 = vpack.c.bf16 %v1068, %v1068
    %v1073 = vpack.c.bf16 %v1069, %v1069
    %v1074 = vpack.c.bf16 %v1070, %v1070
    %v1139 = vunpack.c.l.b16 %v929
    %v1140 = vunpack.c.l.b16 %v930
    %v1141 = vunpack.c.l.b16 %v931
    %v1142 = vunpack.c.l.b16 %v932
    %v1143 = vunpack.c.l.b16 %v933
    %v1144 = vunpack.c.l.b16 %v934
    %v1145 = vunpack.c.l.b16 %v935
    %v1146 = vunpack.c.l.b16 %v936
    %v1147 = vunpack.c.l.b16 %v937
    %v1148 = vunpack.c.l.b16 %v938
    %v1149 = vunpack.c.l.b16 %v939
    %v1150 = vunpack.c.l.b16 %v940
    %v1151 = vunpack.c.l.b16 %v941
    %v1152 = vunpack.c.l.b16 %v942
    %v1153 = vunpack.c.l.b16 %v943
    %v1154 = vunpack.c.l.b16 %v944
    %v1155 = vunpack.c.l.b16 %v945
    %v1156 = vunpack.c.l.b16 %v946
    %v1157 = vunpack.c.l.b16 %v947
    %v1158 = vunpack.c.l.b16 %v948
    %v1159 = vunpack.c.l.b16 %v949
    %v1160 = vunpack.c.l.b16 %v950
    %v1161 = vunpack.c.l.b16 %v951
    %v1162 = vunpack.c.l.b16 %v952
    %v1163 = vunpack.c.l.b16 %v953
    %v1164 = vunpack.c.l.b16 %v954
    %v1165 = vunpack.c.l.b16 %v955
    %v1166 = vunpack.c.l.b16 %v956
    %v1167 = vunpack.c.l.b16 %v957
    %v1168 = vunpack.c.l.b16 %v958
    %v1169 = vunpack.c.l.b16 %v959
    %v1170 = vunpack.c.l.b16 %v960
    %v1171 = vunpack.c.l.b16 %v961
    %v1172 = vunpack.c.l.b16 %v962
    %v1173 = vunpack.c.l.b16 %v963
    %v1174 = vunpack.c.l.b16 %v964
    %v1175 = vunpack.c.l.b16 %v965
    %v1176 = vunpack.c.l.b16 %v966
    %v1177 = vunpack.c.l.b16 %v967
    %v1178 = vunpack.c.l.b16 %v968
    %v1179 = vunpack.c.l.b16 %v969
    %v1180 = vunpack.c.l.b16 %v970
    %v1181 = vunpack.c.l.b16 %v971
    %v1182 = vunpack.c.l.b16 %v972
    %v1183 = vunpack.c.l.b16 %v973
    %v1184 = vunpack.c.l.b16 %v974
    %v1185 = vunpack.c.l.b16 %v975
    %v1186 = vunpack.c.l.b16 %v976
    %v1187 = vunpack.c.l.b16 %v977
    %v1188 = vunpack.c.l.b16 %v978
    %v1189 = vunpack.c.l.b16 %v979
    %v1190 = vunpack.c.l.b16 %v980
    %v1191 = vunpack.c.l.b16 %v981
    %v1192 = vunpack.c.l.b16 %v982
    %v1193 = vunpack.c.l.b16 %v983
    %v1194 = vunpack.c.l.b16 %v984
    %v1195 = vunpack.c.l.b16 %v985
    %v1196 = vunpack.c.l.b16 %v986
    %v1197 = vunpack.c.l.b16 %v987
    %v1198 = vunpack.c.l.b16 %v988
    %v1199 = vunpack.c.l.b16 %v989
    %v1200 = vunpack.c.l.b16 %v990
    %v1201 = vunpack.c.l.b16 %v991
    %v1202 = vunpack.c.l.b16 %v992
    %v1203 = vpack.c.b16 %v1140, %v1139
    %v1204 = vpack.c.b16 %v1142, %v1141
    %v1205 = vpack.c.b16 %v1144, %v1143
    %v1206 = vpack.c.b16 %v1146, %v1145
    %v1207 = vpack.c.b16 %v1148, %v1147
    %v1208 = vpack.c.b16 %v1150, %v1149
    %v1209 = vpack.c.b16 %v1152, %v1151
    %v1210 = vpack.c.b16 %v1154, %v1153
    %v1211 = vpack.c.b16 %v1156, %v1155
    %v1212 = vpack.c.b16 %v1158, %v1157
    %v1213 = vpack.c.b16 %v1160, %v1159
    %v1214 = vpack.c.b16 %v1162, %v1161
    %v1215 = vpack.c.b16 %v1164, %v1163
    %v1216 = vpack.c.b16 %v1166, %v1165
    %v1217 = vpack.c.b16 %v1168, %v1167
    %v1218 = vpack.c.b16 %v1170, %v1169
    %v1219 = vpack.c.b16 %v1172, %v1171
    %v1220 = vpack.c.b16 %v1174, %v1173
    %v1221 = vpack.c.b16 %v1176, %v1175
    %v1222 = vpack.c.b16 %v1178, %v1177
    %v1223 = vpack.c.b16 %v1180, %v1179
    %v1224 = vpack.c.b16 %v1182, %v1181
    %v1225 = vpack.c.b16 %v1184, %v1183
    %v1226 = vpack.c.b16 %v1186, %v1185
    %v1227 = vpack.c.b16 %v1188, %v1187
    %v1228 = vpack.c.b16 %v1190, %v1189
    %v1229 = vpack.c.b16 %v1192, %v1191
    %v1230 = vpack.c.b16 %v1194, %v1193
    %v1231 = vpack.c.b16 %v1196, %v1195
    %v1232 = vpack.c.b16 %v1198, %v1197
    %v1233 = vpack.c.b16 %v1200, %v1199
    %v1234 = vpack.c.b16 %v1202, %v1201
    %1267 = vmatprep.subr.bf16.mxu0 0
    %1268 = vmatpush1.bf16.msra.mxu0 %v1203
    %1269 = vmatprep.subr.bf16.mxu0 0
    %1270 = vmatpush1.bf16.msra.mxu0 %v1204
    %1271 = vmatprep.subr.bf16.mxu0 0
    %1272 = vmatpush1.bf16.msra.mxu0 %v1205
    %1273 = vmatprep.subr.bf16.mxu0 0
    %1274 = vmatpush1.bf16.msra.mxu0 %v1206
    %1275 = vmatprep.subr.bf16.mxu0 0
    %1276 = vmatpush1.bf16.msra.mxu0 %v1207
    %1277 = vmatprep.subr.bf16.mxu0 0
    %1278 = vmatpush1.bf16.msra.mxu0 %v1208
    %1279 = vmatprep.subr.bf16.mxu0 0
    %1280 = vmatpush1.bf16.msra.mxu0 %v1209
    %1281 = vmatprep.subr.bf16.mxu0 0
    %1282 = vmatpush1.bf16.msra.mxu0 %v1210
    %1283 = vmatprep.subr.bf16.mxu0 0
    %1284 = vmatpush1.bf16.msra.mxu0 %v1211
    %1285 = vmatprep.subr.bf16.mxu0 0
    %1286 = vmatpush1.bf16.msra.mxu0 %v1212
    %1287 = vmatprep.subr.bf16.mxu0 0
    %1288 = vmatpush1.bf16.msra.mxu0 %v1213
    %1289 = vmatprep.subr.bf16.mxu0 0
    %1290 = vmatpush1.bf16.msra.mxu0 %v1214
    %1291 = vmatprep.subr.bf16.mxu0 0
    %1292 = vmatpush1.bf16.msra.mxu0 %v1215
    %1293 = vmatprep.subr.bf16.mxu0 0
    %1294 = vmatpush1.bf16.msra.mxu0 %v1216
    %1295 = vmatprep.subr.bf16.mxu0 0
    %1296 = vmatpush1.bf16.msra.mxu0 %v1217
    %1297 = vmatprep.subr.bf16.mxu0 0
    %1298 = vmatpush1.bf16.msra.mxu0 %v1218
    %1299 = vmatprep.mubr.bf16.mxu0 %v1072
    %1300 = vmatmul.mubr.bf16.gmra.mrb[0].mxu0 %v1071
    %v1301 = vpop.f32.mrb[0].mxu0
    %v1302 = vadd.f32 0.0, %v1301
    %v1303 = vpop.f32.mrb[0].mxu0
    %v1304 = vpop.f32.mrb[0].mxu0
    %v1305 = vpop.f32.mrb[0].mxu0
    %1306 = vdwg.mxu0
    %1307 = vmatprep.subr.bf16.mxu0 0
    %1308 = vmatpush1.bf16.msra.mxu0 %v1219
    %1309 = vmatprep.subr.bf16.mxu0 0
    %1310 = vmatpush1.bf16.msra.mxu0 %v1220
    %1311 = vmatprep.subr.bf16.mxu0 0
    %1312 = vmatpush1.bf16.msra.mxu0 %v1221
    %1313 = vmatprep.subr.bf16.mxu0 0
    %1314 = vmatpush1.bf16.msra.mxu0 %v1222
    %1315 = vmatprep.subr.bf16.mxu0 0
    %1316 = vmatpush1.bf16.msra.mxu0 %v1223
    %1317 = vmatprep.subr.bf16.mxu0 0
    %1318 = vmatpush1.bf16.msra.mxu0 %v1224
    %1319 = vmatprep.subr.bf16.mxu0 0
    %1320 = vmatpush1.bf16.msra.mxu0 %v1225
    %1321 = vmatprep.subr.bf16.mxu0 0
    %1322 = vmatpush1.bf16.msra.mxu0 %v1226
    %1323 = vmatprep.subr.bf16.mxu0 0
    %1324 = vmatpush1.bf16.msra.mxu0 %v1227
    %1325 = vmatprep.subr.bf16.mxu0 0
    %1326 = vmatpush1.bf16.msra.mxu0 %v1228
    %1327 = vmatprep.subr.bf16.mxu0 0
    %1328 = vmatpush1.bf16.msra.mxu0 %v1229
    %1329 = vmatprep.subr.bf16.mxu0 0
    %1330 = vmatpush1.bf16.msra.mxu0 %v1230
    %1331 = vmatprep.subr.bf16.mxu0 0
    %1332 = vmatpush1.bf16.msra.mxu0 %v1231
    %1333 = vmatprep.subr.bf16.mxu0 0
    %1334 = vmatpush1.bf16.msra.mxu0 %v1232
    %1335 = vmatprep.subr.bf16.mxu0 0
    %1336 = vmatpush1.bf16.msra.mxu0 %v1233
    %1337 = vmatprep.subr.bf16.mxu0 0
    %1338 = vmatpush1.bf16.msra.mxu0 %v1234
    %1339 = vmatprep.mubr.bf16.mxu0 %v1074
    %1340 = vmatmul.mubr.bf16.gmra.mrb[0].mxu0 %v1073
    %v1341 = vpop.f32.mrb[0].mxu0
    %v1342 = vadd.f32 %v1302, %v1341
    %v1343 = vpop.f32.mrb[0].mxu0
    %v1344 = vpop.f32.mrb[0].mxu0
    %v1345 = vpop.f32.mrb[0].mxu0
    %1346 = vdwg.mxu0
    %v1347 = vmul.f32 %v1342, 0.0009765625
    %v1348 = vmul.f32 %v1347, %v1347
    %v1350 = vrot.slane %v1348, 7
    %v1352 = vsub.f32 %v1347, %v1350
    %v1353 = vmax.f32 %v1352, 0.0
    %v1354 = vadd.f32 %v1353, 1e-05
    %v1355 = vrsqrt.pop %v1354
    %v1357 = vrot.slane %v1355, 1
    %v1359 = vmul.f32 %v928, %v1357
    %v1360 = vmul.f32 %v1347, %v1359
    %v1362 = vrot.slane %v1360, 7
    %v1364 = vsub.f32 %v928, %v1362
    %v1365 = vlaneseq
    %v1366 = vshrl.u32 %v1365, 7
    %v1367 = vsub.s32 0, %v1366
    %v1368 = vrot.slane %v1359, %v1367
    %v1369 = vmul.f32 %v71, %v1368
    %v1370 = vlaneseq
    %v1371 = vshrl.u32 %v1370, 7
    %v1372 = vsub.s32 1, %v1371
    %v1373 = vrot.slane %v1364, %v1372
    %v1374 = vmul.f32 %v72, %v1373
    %v1375 = vadd.f32 %v1369, %v1374
    %v1376 = vpack.c.bf16 %v1375, %v1375
    %v1379 = vunpack.c.l.b16 %v993
    %v1380 = vunpack.c.h.b16 %v993
    %v1381 = vunpack.c.l.b16 %v994
    %v1382 = vunpack.c.h.b16 %v994
    %v1383 = vpack.c.b16 %v1379, %v1379
    %v1384 = vpack.c.b16 %v1380, %v1380
    %v1385 = vpack.c.b16 %v1381, %v1381
    %v1386 = vpack.c.b16 %v1382, %v1382
    %vm1387 = vcmask 64512
    %v1389 = vsel %vm1387, %v1376, 0
    %vm1391 = vcmask 1043456
    %v1393 = vsel %vm1391, %v1383, 0
    %v1396 = vsel %vm1391, %v1384, 0
    %v1399 = vsel %vm1391, %v1385, 0
    %v1402 = vsel %vm1391, %v1386, 0
    %1404 = vmatprep.subr.bf16.mxu0 %v1396
    %1405 = vmatpush1.bf16.msra.mxu0 %v1393
    %1406 = vmatprep.subr.bf16.mxu0 0
    %1407 = vmatpush1.bf16.msra.mxu0 0
    %1408 = vmatprep.subr.bf16.mxu0 0
    %1409 = vmatpush1.bf16.msra.mxu0 0
    %1410 = vmatprep.subr.bf16.mxu0 0
    %1411 = vmatpush1.bf16.msra.mxu0 0
    %1412 = vmatprep.subr.bf16.mxu0 0
    %1413 = vmatpush1.bf16.msra.mxu0 0
    %1414 = vmatprep.subr.bf16.mxu0 0
    %1415 = vmatpush1.bf16.msra.mxu0 0
    %1416 = vmatprep.subr.bf16.mxu0 0
    %1417 = vmatpush1.bf16.msra.mxu0 0
    %1418 = vmatprep.subr.bf16.mxu0 0
    %1419 = vmatpush1.bf16.msra.mxu0 0
    %1420 = vmatprep.subr.bf16.mxu0 0
    %1421 = vmatpush1.bf16.msra.mxu0 0
    %1422 = vmatprep.subr.bf16.mxu0 0
    %1423 = vmatpush1.bf16.msra.mxu0 0
    %1424 = vmatprep.subr.bf16.mxu0 0
    %1425 = vmatpush1.bf16.msra.mxu0 0
    %1426 = vmatprep.subr.bf16.mxu0 0
    %1427 = vmatpush1.bf16.msra.mxu0 0
    %1428 = vmatprep.subr.bf16.mxu0 0
    %1429 = vmatpush1.bf16.msra.mxu0 0
    %1430 = vmatprep.subr.bf16.mxu0 0
    %1431 = vmatpush1.bf16.msra.mxu0 0
    %1432 = vmatprep.subr.bf16.mxu0 0
    %1433 = vmatpush1.bf16.msra.mxu0 0
    %1434 = vmatprep.subr.bf16.mxu0 0
    %1435 = vmatpush1.bf16.msra.mxu0 0
    %1436 = vmatprep.mubr.bf16.mxu0 0
    %1437 = vmatmul.mubr.bf16.gmra.mrb[0].mxu0 %v1389
    %v1438 = vpop.f32.mrb[0].mxu0
    %v1439 = vadd.f32 0.0, %v1438
    %v1440 = vpop.f32.mrb[0].mxu0
    %v1441 = vadd.f32 0.0, %v1440
    %v1442 = vpop.f32.mrb[0].mxu0
    %v1443 = vpop.f32.mrb[0].mxu0
    %1444 = vdwg.mxu0
    %1445 = vmatprep.subr.bf16.mxu0 %v1402
    %1446 = vmatpush1.bf16.msra.mxu0 %v1399
    %1447 = vmatprep.subr.bf16.mxu0 0
    %1448 = vmatpush1.bf16.msra.mxu0 0
    %1449 = vmatprep.subr.bf16.mxu0 0
    %1450 = vmatpush1.bf16.msra.mxu0 0
    %1451 = vmatprep.subr.bf16.mxu0 0
    %1452 = vmatpush1.bf16.msra.mxu0 0
    %1453 = vmatprep.subr.bf16.mxu0 0
    %1454 = vmatpush1.bf16.msra.mxu0 0
    %1455 = vmatprep.subr.bf16.mxu0 0
    %1456 = vmatpush1.bf16.msra.mxu0 0
    %1457 = vmatprep.subr.bf16.mxu0 0
    %1458 = vmatpush1.bf16.msra.mxu0 0
    %1459 = vmatprep.subr.bf16.mxu0 0
    %1460 = vmatpush1.bf16.msra.mxu0 0
    %1461 = vmatprep.subr.bf16.mxu0 0
    %1462 = vmatpush1.bf16.msra.mxu0 0
    %1463 = vmatprep.subr.bf16.mxu0 0
    %1464 = vmatpush1.bf16.msra.mxu0 0
    %1465 = vmatprep.subr.bf16.mxu0 0
    %1466 = vmatpush1.bf16.msra.mxu0 0
    %1467 = vmatprep.subr.bf16.mxu0 0
    %1468 = vmatpush1.bf16.msra.mxu0 0
    %1469 = vmatprep.subr.bf16.mxu0 0
    %1470 = vmatpush1.bf16.msra.mxu0 0
    %1471 = vmatprep.subr.bf16.mxu0 0
    %1472 = vmatpush1.bf16.msra.mxu0 0
    %1473 = vmatprep.subr.bf16.mxu0 0
    %1474 = vmatpush1.bf16.msra.mxu0 0
    %1475 = vmatprep.subr.bf16.mxu0 0
    %1476 = vmatpush1.bf16.msra.mxu0 0
    %1477 = vmatprep.mubr.bf16.mxu0 0
    %1478 = vmatmul.mubr.bf16.gmra.mrb[0].mxu0 %v1389
    %v1479 = vpop.f32.mrb[0].mxu0
    %v1480 = vadd.f32 0.0, %v1479
    %v1481 = vpop.f32.mrb[0].mxu0
    %v1482 = vadd.f32 0.0, %v1481
    %v1483 = vpop.f32.mrb[0].mxu0
    %v1484 = vpop.f32.mrb[0].mxu0
    %1485 = vdwg.mxu0
    %v1486 = vlaneseq
    %v1487 = vshrl.u32 %v1486, 7
    %v1488 = vsub.s32 0, %v1487
    %v1489 = vrot.slane %v1439, %v1488
    %v1490 = vlaneseq
    %v1491 = vshrl.u32 %v1490, 7
    %v1492 = vsub.s32 0, %v1491
    %v1493 = vrot.slane %v1441, %v1492
    %v1494 = vlaneseq
    %v1495 = vshrl.u32 %v1494, 7
    %v1496 = vsub.s32 0, %v1495
    %v1497 = vrot.slane %v1480, %v1496
    %v1498 = vlaneseq
    %v1499 = vshrl.u32 %v1498, 7
    %v1500 = vsub.s32 0, %v1499
    %v1501 = vrot.slane %v1482, %v1500
    %v1502 = vmul.f32 %v877, %v1489
    %v1503 = vmul.f32 %v879, %v1493
    %v1504 = vmul.f32 %v920, %v1497
    %v1505 = vmul.f32 %v922, %v1501
    %v1506 = vmul.f32 %v881, %v1489
    %v1507 = vmul.f32 %v883, %v1493
    %v1508 = vmul.f32 %v924, %v1497
    %v1509 = vmul.f32 %v926, %v1501
    %v1510 = vlaneseq
    %v1511 = vshrl.u32 %v1510, 7
    %v1512 = vsub.s32 1, %v1511
    %v1513 = vrot.slane %v1439, %v1512
    %v1514 = vlaneseq
    %v1515 = vshrl.u32 %v1514, 7
    %v1516 = vsub.s32 1, %v1515
    %v1517 = vrot.slane %v1441, %v1516
    %v1518 = vlaneseq
    %v1519 = vshrl.u32 %v1518, 7
    %v1520 = vsub.s32 1, %v1519
    %v1521 = vrot.slane %v1480, %v1520
    %v1522 = vlaneseq
    %v1523 = vshrl.u32 %v1522, 7
    %v1524 = vsub.s32 1, %v1523
    %v1525 = vrot.slane %v1482, %v1524
    %v1526 = vadd.f32 %v1502, %v1513
    %v1527 = vadd.f32 %v1503, %v1517
    %v1528 = vadd.f32 %v1504, %v1521
    %v1529 = vadd.f32 %v1505, %v1525
    %v1530 = vadd.f32 %v1506, %v1513
    %v1531 = vadd.f32 %v1507, %v1517
    %v1532 = vadd.f32 %v1508, %v1521
    %v1533 = vadd.f32 %v1509, %v1525
    %v1534 = vmax.f32 %v1526, 0.0
    %v1535 = vmax.f32 %v1527, 0.0
    %v1536 = vmax.f32 %v1528, 0.0
    %v1537 = vmax.f32 %v1529, 0.0
    %v1538 = vmax.f32 %v1530, 0.0
    %v1539 = vmax.f32 %v1531, 0.0
    %v1540 = vmax.f32 %v1532, 0.0
    %v1541 = vmax.f32 %v1533, 0.0
    %v1542 = vld [vmem:[#allocation5] sm:$0xff]
    %v1543 = vld [vmem:[#allocation5 + $0x8] sm:$0xff]
    %v1544 = vld [vmem:[#allocation5 + $0x10] sm:$0xff]
    %v1545 = vld [vmem:[#allocation5 + $0x18] sm:$0xff]
    %v1546 = vld [vmem:[#allocation5 + $0x20] sm:$0xff]
    %v1547 = vld [vmem:[#allocation5 + $0x28] sm:$0xff]
    %v1548 = vld [vmem:[#allocation5 + $0x30] sm:$0xff]
    %v1549 = vld [vmem:[#allocation5 + $0x38] sm:$0xff]
    %v1550 = vld [vmem:[#allocation5 + $0x40] sm:$0xff]
    %v1551 = vld [vmem:[#allocation5 + $0x48] sm:$0xff]
    %v1552 = vld [vmem:[#allocation5 + $0x50] sm:$0xff]
    %v1553 = vld [vmem:[#allocation5 + $0x58] sm:$0xff]
    %v1554 = vld [vmem:[#allocation5 + $0x60] sm:$0xff]
    %v1555 = vld [vmem:[#allocation5 + $0x68] sm:$0xff]
    %v1556 = vld [vmem:[#allocation5 + $0x70] sm:$0xff]
    %v1557 = vld [vmem:[#allocation5 + $0x78] sm:$0xff]
    %v1558 = vld [vmem:[#allocation5 + $0x80] sm:$0xff]
    %v1559 = vld [vmem:[#allocation5 + $0x88] sm:$0xff]
    %v1560 = vld [vmem:[#allocation5 + $0x90] sm:$0xff]
    %v1561 = vld [vmem:[#allocation5 + $0x98] sm:$0xff]
    %v1562 = vld [vmem:[#allocation5 + $0xa0] sm:$0xff]
    %v1563 = vld [vmem:[#allocation5 + $0xa8] sm:$0xff]
    %v1564 = vld [vmem:[#allocation5 + $0xb0] sm:$0xff]
    %v1565 = vld [vmem:[#allocation5 + $0xb8] sm:$0xff]
    %v1566 = vld [vmem:[#allocation5 + $0xc0] sm:$0xff]
    %v1567 = vld [vmem:[#allocation5 + $0xc8] sm:$0xff]
    %v1568 = vld [vmem:[#allocation5 + $0xd0] sm:$0xff]
    %v1569 = vld [vmem:[#allocation5 + $0xd8] sm:$0xff]
    %v1570 = vld [vmem:[#allocation5 + $0xe0] sm:$0xff]
    %v1571 = vld [vmem:[#allocation5 + $0xe8] sm:$0xff]
    %v1572 = vld [vmem:[#allocation5 + $0xf0] sm:$0xff]
    %v1573 = vld [vmem:[#allocation5 + $0xf8] sm:$0xff]
    %v1574 = vld [vmem:[#allocation5 + $0x100] sm:$0xff]
    %v1575 = vld [vmem:[#allocation5 + $0x108] sm:$0xff]
    %v1576 = vld [vmem:[#allocation5 + $0x110] sm:$0xff]
    %v1577 = vld [vmem:[#allocation5 + $0x118] sm:$0xff]
    %v1578 = vld [vmem:[#allocation5 + $0x120] sm:$0xff]
    %v1579 = vld [vmem:[#allocation5 + $0x128] sm:$0xff]
    %v1580 = vld [vmem:[#allocation5 + $0x130] sm:$0xff]
    %v1581 = vld [vmem:[#allocation5 + $0x138] sm:$0xff]
    %v1582 = vld [vmem:[#allocation5 + $0x140] sm:$0xff]
    %v1583 = vld [vmem:[#allocation5 + $0x148] sm:$0xff]
    %v1584 = vld [vmem:[#allocation5 + $0x150] sm:$0xff]
    %v1585 = vld [vmem:[#allocation5 + $0x158] sm:$0xff]
    %v1586 = vld [vmem:[#allocation5 + $0x160] sm:$0xff]
    %v1587 = vld [vmem:[#allocation5 + $0x168] sm:$0xff]
    %v1588 = vld [vmem:[#allocation5 + $0x170] sm:$0xff]
    %v1589 = vld [vmem:[#allocation5 + $0x178] sm:$0xff]
    %v1590 = vld [vmem:[#allocation5 + $0x180] sm:$0xff]
    %v1591 = vld [vmem:[#allocation5 + $0x188] sm:$0xff]
    %v1592 = vld [vmem:[#allocation5 + $0x190] sm:$0xff]
    %v1593 = vld [vmem:[#allocation5 + $0x198] sm:$0xff]
    %v1594 = vld [vmem:[#allocation5 + $0x1a0] sm:$0xff]
    %v1595 = vld [vmem:[#allocation5 + $0x1a8] sm:$0xff]
    %v1596 = vld [vmem:[#allocation5 + $0x1b0] sm:$0xff]
    %v1597 = vld [vmem:[#allocation5 + $0x1b8] sm:$0xff]
    %v1598 = vld [vmem:[#allocation5 + $0x1c0] sm:$0xff]
    %v1599 = vld [vmem:[#allocation5 + $0x1c8] sm:$0xff]
    %v1600 = vld [vmem:[#allocation5 + $0x1d0] sm:$0xff]
    %v1601 = vld [vmem:[#allocation5 + $0x1d8] sm:$0xff]
    %v1602 = vld [vmem:[#allocation5 + $0x1e0] sm:$0xff]
    %v1603 = vld [vmem:[#allocation5 + $0x1e8] sm:$0xff]
    %v1604 = vld [vmem:[#allocation5 + $0x1f0] sm:$0xff]
    %v1605 = vld [vmem:[#allocation5 + $0x1f8] sm:$0xff]
    %v1606 = vld [vmem:[#allocation5 + $0x200] sm:$0xff]
    %v1607 = vld [vmem:[#allocation5 + $0x208] sm:$0xff]
    %v1608 = vld [vmem:[#allocation5 + $0x210] sm:$0xff]
    %v1609 = vld [vmem:[#allocation5 + $0x218] sm:$0xff]
    %v1610 = vld [vmem:[#allocation5 + $0x220] sm:$0xff]
    %v1611 = vld [vmem:[#allocation5 + $0x228] sm:$0xff]
    %v1612 = vld [vmem:[#allocation5 + $0x230] sm:$0xff]
    %v1613 = vld [vmem:[#allocation5 + $0x238] sm:$0xff]
    %v1614 = vld [vmem:[#allocation5 + $0x240] sm:$0xff]
    %v1615 = vld [vmem:[#allocation5 + $0x248] sm:$0xff]
    %v1616 = vld [vmem:[#allocation5 + $0x250] sm:$0xff]
    %v1617 = vld [vmem:[#allocation5 + $0x258] sm:$0xff]
    %v1618 = vld [vmem:[#allocation5 + $0x260] sm:$0xff]
    %v1619 = vld [vmem:[#allocation5 + $0x268] sm:$0xff]
    %v1620 = vld [vmem:[#allocation5 + $0x270] sm:$0xff]
    %v1621 = vld [vmem:[#allocation5 + $0x278] sm:$0xff]
    %v1622 = vld [vmem:[#allocation5 + $0x280] sm:$0xff]
    %v1623 = vld [vmem:[#allocation5 + $0x288] sm:$0xff]
    %v1624 = vld [vmem:[#allocation5 + $0x290] sm:$0xff]
    %v1625 = vld [vmem:[#allocation5 + $0x298] sm:$0xff]
    %v1626 = vld [vmem:[#allocation5 + $0x2a0] sm:$0xff]
    %v1627 = vld [vmem:[#allocation5 + $0x2a8] sm:$0xff]
    %v1628 = vld [vmem:[#allocation5 + $0x2b0] sm:$0xff]
    %v1629 = vld [vmem:[#allocation5 + $0x2b8] sm:$0xff]
    %v1630 = vld [vmem:[#allocation5 + $0x2c0] sm:$0xff]
    %v1631 = vld [vmem:[#allocation5 + $0x2c8] sm:$0xff]
    %v1632 = vld [vmem:[#allocation5 + $0x2d0] sm:$0xff]
    %v1633 = vld [vmem:[#allocation5 + $0x2d8] sm:$0xff]
    %v1634 = vld [vmem:[#allocation5 + $0x2e0] sm:$0xff]
    %v1635 = vld [vmem:[#allocation5 + $0x2e8] sm:$0xff]
    %v1636 = vld [vmem:[#allocation5 + $0x2f0] sm:$0xff]
    %v1637 = vld [vmem:[#allocation5 + $0x2f8] sm:$0xff]
    %v1638 = vld [vmem:[#allocation5 + $0x300] sm:$0xff]
    %v1639 = vld [vmem:[#allocation5 + $0x308] sm:$0xff]
    %v1640 = vld [vmem:[#allocation5 + $0x310] sm:$0xff]
    %v1641 = vld [vmem:[#allocation5 + $0x318] sm:$0xff]
    %v1642 = vld [vmem:[#allocation5 + $0x320] sm:$0xff]
    %v1643 = vld [vmem:[#allocation5 + $0x328] sm:$0xff]
    %v1644 = vld [vmem:[#allocation5 + $0x330] sm:$0xff]
    %v1645 = vld [vmem:[#allocation5 + $0x338] sm:$0xff]
    %v1646 = vld [vmem:[#allocation5 + $0x340] sm:$0xff]
    %v1647 = vld [vmem:[#allocation5 + $0x348] sm:$0xff]
    %v1648 = vld [vmem:[#allocation5 + $0x350] sm:$0xff]
    %v1649 = vld [vmem:[#allocation5 + $0x358] sm:$0xff]
    %v1650 = vld [vmem:[#allocation5 + $0x360] sm:$0xff]
    %v1651 = vld [vmem:[#allocation5 + $0x368] sm:$0xff]
    %v1652 = vld [vmem:[#allocation5 + $0x370] sm:$0xff]
    %v1653 = vld [vmem:[#allocation5 + $0x378] sm:$0xff]
    %v1654 = vld [vmem:[#allocation5 + $0x380] sm:$0xff]
    %v1655 = vld [vmem:[#allocation5 + $0x388] sm:$0xff]
    %v1656 = vld [vmem:[#allocation5 + $0x390] sm:$0xff]
    %v1657 = vld [vmem:[#allocation5 + $0x398] sm:$0xff]
    %v1658 = vld [vmem:[#allocation5 + $0x3a0] sm:$0xff]
    %v1659 = vld [vmem:[#allocation5 + $0x3a8] sm:$0xff]
    %v1660 = vld [vmem:[#allocation5 + $0x3b0] sm:$0xff]
    %v1661 = vld [vmem:[#allocation5 + $0x3b8] sm:$0xff]
    %v1662 = vld [vmem:[#allocation5 + $0x3c0] sm:$0xff]
    %v1663 = vld [vmem:[#allocation5 + $0x3c8] sm:$0xff]
    %v1664 = vld [vmem:[#allocation5 + $0x3d0] sm:$0xff]
    %v1665 = vld [vmem:[#allocation5 + $0x3d8] sm:$0xff]
    %v1666 = vld [vmem:[#allocation5 + $0x3e0] sm:$0xff]
    %v1667 = vld [vmem:[#allocation5 + $0x3e8] sm:$0xff]
    %v1668 = vld [vmem:[#allocation5 + $0x3f0] sm:$0xff]
    %v1669 = vld [vmem:[#allocation5 + $0x3f8] sm:$0xff]
    %v1670 = vld [vmem:[#allocation5 + $0x400] sm:$0xff]
    %v1671 = vld [vmem:[#allocation5 + $0x408] sm:$0xff]
    %v1672 = vld [vmem:[#allocation5 + $0x410] sm:$0xff]
    %v1673 = vld [vmem:[#allocation5 + $0x418] sm:$0xff]
    %v1674 = vld [vmem:[#allocation5 + $0x420] sm:$0xff]
    %v1675 = vld [vmem:[#allocation5 + $0x428] sm:$0xff]
    %v1676 = vld [vmem:[#allocation5 + $0x430] sm:$0xff]
    %v1677 = vld [vmem:[#allocation5 + $0x438] sm:$0xff]
    %v1678 = vld [vmem:[#allocation5 + $0x440] sm:$0xff]
    %v1679 = vld [vmem:[#allocation5 + $0x448] sm:$0xff]
    %v1680 = vld [vmem:[#allocation5 + $0x450] sm:$0xff]
    %v1681 = vld [vmem:[#allocation5 + $0x458] sm:$0xff]
    %v1682 = vld [vmem:[#allocation5 + $0x460] sm:$0xff]
    %v1683 = vld [vmem:[#allocation5 + $0x468] sm:$0xff]
    %v1684 = vld [vmem:[#allocation5 + $0x470] sm:$0xff]
    %v1685 = vld [vmem:[#allocation5 + $0x478] sm:$0xff]
    %v1686 = vld [vmem:[#allocation5 + $0x480] sm:$0xff]
    %v1687 = vld [vmem:[#allocation5 + $0x488] sm:$0xff]
    %v1688 = vld [vmem:[#allocation5 + $0x490] sm:$0xff]
    %v1689 = vld [vmem:[#allocation5 + $0x498] sm:$0xff]
    %v1690 = vld [vmem:[#allocation5 + $0x4a0] sm:$0xff]
    %v1691 = vld [vmem:[#allocation5 + $0x4a8] sm:$0xff]
    %v1692 = vld [vmem:[#allocation5 + $0x4b0] sm:$0xff]
    %v1693 = vld [vmem:[#allocation5 + $0x4b8] sm:$0xff]
    %v1694 = vld [vmem:[#allocation5 + $0x4c0] sm:$0xff]
    %v1695 = vld [vmem:[#allocation5 + $0x4c8] sm:$0xff]
    %v1696 = vld [vmem:[#allocation5 + $0x4d0] sm:$0xff]
    %v1697 = vld [vmem:[#allocation5 + $0x4d8] sm:$0xff]
    %v1698 = vld [vmem:[#allocation5 + $0x4e0] sm:$0xff]
    %v1699 = vld [vmem:[#allocation5 + $0x4e8] sm:$0xff]
    %v1700 = vld [vmem:[#allocation5 + $0x4f0] sm:$0xff]
    %v1701 = vld [vmem:[#allocation5 + $0x4f8] sm:$0xff]
    %v1702 = vld [vmem:[#allocation5 + $0x500] sm:$0xff]
    %v1703 = vld [vmem:[#allocation5 + $0x508] sm:$0xff]
    %v1704 = vld [vmem:[#allocation5 + $0x510] sm:$0xff]
    %v1705 = vld [vmem:[#allocation5 + $0x518] sm:$0xff]
    %v1706 = vld [vmem:[#allocation5 + $0x520] sm:$0xff]
    %v1707 = vld [vmem:[#allocation5 + $0x528] sm:$0xff]
    %v1708 = vld [vmem:[#allocation5 + $0x530] sm:$0xff]
    %v1709 = vld [vmem:[#allocation5 + $0x538] sm:$0xff]
    %v1710 = vld [vmem:[#allocation5 + $0x540] sm:$0xff]
    %v1711 = vld [vmem:[#allocation5 + $0x548] sm:$0xff]
    %v1712 = vld [vmem:[#allocation5 + $0x550] sm:$0xff]
    %v1713 = vld [vmem:[#allocation5 + $0x558] sm:$0xff]
    %v1714 = vld [vmem:[#allocation5 + $0x560] sm:$0xff]
    %v1715 = vld [vmem:[#allocation5 + $0x568] sm:$0xff]
    %v1716 = vld [vmem:[#allocation5 + $0x570] sm:$0xff]
    %v1717 = vld [vmem:[#allocation5 + $0x578] sm:$0xff]
    %v1718 = vld [vmem:[#allocation5 + $0x580] sm:$0xff]
    %v1719 = vld [vmem:[#allocation5 + $0x588] sm:$0xff]
    %v1720 = vld [vmem:[#allocation5 + $0x590] sm:$0xff]
    %v1721 = vld [vmem:[#allocation5 + $0x598] sm:$0xff]
    %v1722 = vld [vmem:[#allocation5 + $0x5a0] sm:$0xff]
    %v1723 = vld [vmem:[#allocation5 + $0x5a8] sm:$0xff]
    %v1724 = vld [vmem:[#allocation5 + $0x5b0] sm:$0xff]
    %v1725 = vld [vmem:[#allocation5 + $0x5b8] sm:$0xff]
    %v1726 = vld [vmem:[#allocation5 + $0x5c0] sm:$0xff]
    %v1727 = vld [vmem:[#allocation5 + $0x5c8] sm:$0xff]
    %v1728 = vld [vmem:[#allocation5 + $0x5d0] sm:$0xff]
    %v1729 = vld [vmem:[#allocation5 + $0x5d8] sm:$0xff]
    %v1730 = vld [vmem:[#allocation5 + $0x5e0] sm:$0xff]
    %v1731 = vld [vmem:[#allocation5 + $0x5e8] sm:$0xff]
    %v1732 = vld [vmem:[#allocation5 + $0x5f0] sm:$0xff]
    %v1733 = vld [vmem:[#allocation5 + $0x5f8] sm:$0xff]
    %v1734 = vpack.c.bf16 %v1538, %v1534
    %v1735 = vpack.c.bf16 %v1539, %v1535
    %v1736 = vpack.c.bf16 %v1540, %v1536
    %v1737 = vpack.c.bf16 %v1541, %v1537
    %v1930 = vunpack.c.l.b16 %v1542
    %v1931 = vunpack.c.h.b16 %v1542
    %v1932 = vunpack.c.l.b16 %v1543
    %v1933 = vunpack.c.h.b16 %v1543
    %v1934 = vunpack.c.l.b16 %v1544
    %v1935 = vunpack.c.h.b16 %v1544
    %v1936 = vunpack.c.l.b16 %v1545
    %v1937 = vunpack.c.h.b16 %v1545
    %v1938 = vunpack.c.l.b16 %v1546
    %v1939 = vunpack.c.h.b16 %v1546
    %v1940 = vunpack.c.l.b16 %v1547
    %v1941 = vunpack.c.h.b16 %v1547
    %v1942 = vunpack.c.l.b16 %v1548
    %v1943 = vunpack.c.h.b16 %v1548
    %v1944 = vunpack.c.l.b16 %v1549
    %v1945 = vunpack.c.h.b16 %v1549
    %v1946 = vunpack.c.l.b16 %v1550
    %v1947 = vunpack.c.h.b16 %v1550
    %v1948 = vunpack.c.l.b16 %v1551
    %v1949 = vunpack.c.h.b16 %v1551
    %v1950 = vunpack.c.l.b16 %v1552
    %v1951 = vunpack.c.h.b16 %v1552
    %v1952 = vunpack.c.l.b16 %v1553
    %v1953 = vunpack.c.h.b16 %v1553
    %v1954 = vunpack.c.l.b16 %v1554
    %v1955 = vunpack.c.h.b16 %v1554
    %v1956 = vunpack.c.l.b16 %v1555
    %v1957 = vunpack.c.h.b16 %v1555
    %v1958 = vunpack.c.l.b16 %v1556
    %v1959 = vunpack.c.h.b16 %v1556
    %v1960 = vunpack.c.l.b16 %v1557
    %v1961 = vunpack.c.h.b16 %v1557
    %v1962 = vunpack.c.l.b16 %v1558
    %v1963 = vunpack.c.h.b16 %v1558
    %v1964 = vunpack.c.l.b16 %v1559
    %v1965 = vunpack.c.h.b16 %v1559
    %v1966 = vunpack.c.l.b16 %v1560
    %v1967 = vunpack.c.h.b16 %v1560
    %v1968 = vunpack.c.l.b16 %v1561
    %v1969 = vunpack.c.h.b16 %v1561
    %v1970 = vunpack.c.l.b16 %v1562
    %v1971 = vunpack.c.h.b16 %v1562
    %v1972 = vunpack.c.l.b16 %v1563
    %v1973 = vunpack.c.h.b16 %v1563
    %v1974 = vunpack.c.l.b16 %v1564
    %v1975 = vunpack.c.h.b16 %v1564
    %v1976 = vunpack.c.l.b16 %v1565
    %v1977 = vunpack.c.h.b16 %v1565
    %v1978 = vunpack.c.l.b16 %v1566
    %v1979 = vunpack.c.h.b16 %v1566
    %v1980 = vunpack.c.l.b16 %v1567
    %v1981 = vunpack.c.h.b16 %v1567
    %v1982 = vunpack.c.l.b16 %v1568
    %v1983 = vunpack.c.h.b16 %v1568
    %v1984 = vunpack.c.l.b16 %v1569
    %v1985 = vunpack.c.h.b16 %v1569
    %v1986 = vunpack.c.l.b16 %v1570
    %v1987 = vunpack.c.h.b16 %v1570
    %v1988 = vunpack.c.l.b16 %v1571
    %v1989 = vunpack.c.h.b16 %v1571
    %v1990 = vunpack.c.l.b16 %v1572
    %v1991 = vunpack.c.h.b16 %v1572
    %v1992 = vunpack.c.l.b16 %v1573
    %v1993 = vunpack.c.h.b16 %v1573
    %v1994 = vunpack.c.l.b16 %v1574
    %v1995 = vunpack.c.h.b16 %v1574
    %v1996 = vunpack.c.l.b16 %v1575
    %v1997 = vunpack.c.h.b16 %v1575
    %v1998 = vunpack.c.l.b16 %v1576
    %v1999 = vunpack.c.h.b16 %v1576
    %v2000 = vunpack.c.l.b16 %v1577
    %v2001 = vunpack.c.h.b16 %v1577
    %v2002 = vunpack.c.l.b16 %v1578
    %v2003 = vunpack.c.h.b16 %v1578
    %v2004 = vunpack.c.l.b16 %v1579
    %v2005 = vunpack.c.h.b16 %v1579
    %v2006 = vunpack.c.l.b16 %v1580
    %v2007 = vunpack.c.h.b16 %v1580
    %v2008 = vunpack.c.l.b16 %v1581
    %v2009 = vunpack.c.h.b16 %v1581
    %v2010 = vunpack.c.l.b16 %v1582
    %v2011 = vunpack.c.h.b16 %v1582
    %v2012 = vunpack.c.l.b16 %v1583
    %v2013 = vunpack.c.h.b16 %v1583
    %v2014 = vunpack.c.l.b16 %v1584
    %v2015 = vunpack.c.h.b16 %v1584
    %v2016 = vunpack.c.l.b16 %v1585
    %v2017 = vunpack.c.h.b16 %v1585
    %v2018 = vunpack.c.l.b16 %v1586
    %v2019 = vunpack.c.h.b16 %v1586
    %v2020 = vunpack.c.l.b16 %v1587
    %v2021 = vunpack.c.h.b16 %v1587
    %v2022 = vunpack.c.l.b16 %v1588
    %v2023 = vunpack.c.h.b16 %v1588
    %v2024 = vunpack.c.l.b16 %v1589
    %v2025 = vunpack.c.h.b16 %v1589
    %v2026 = vunpack.c.l.b16 %v1590
    %v2027 = vunpack.c.h.b16 %v1590
    %v2028 = vunpack.c.l.b16 %v1591
    %v2029 = vunpack.c.h.b16 %v1591
    %v2030 = vunpack.c.l.b16 %v1592
    %v2031 = vunpack.c.h.b16 %v1592
    %v2032 = vunpack.c.l.b16 %v1593
    %v2033 = vunpack.c.h.b16 %v1593
    %v2034 = vunpack.c.l.b16 %v1594
    %v2035 = vunpack.c.h.b16 %v1594
    %v2036 = vunpack.c.l.b16 %v1595
    %v2037 = vunpack.c.h.b16 %v1595
    %v2038 = vunpack.c.l.b16 %v1596
    %v2039 = vunpack.c.h.b16 %v1596
    %v2040 = vunpack.c.l.b16 %v1597
    %v2041 = vunpack.c.h.b16 %v1597
    %v2042 = vunpack.c.l.b16 %v1598
    %v2043 = vunpack.c.h.b16 %v1598
    %v2044 = vunpack.c.l.b16 %v1599
    %v2045 = vunpack.c.h.b16 %v1599
    %v2046 = vunpack.c.l.b16 %v1600
    %v2047 = vunpack.c.h.b16 %v1600
    %v2048 = vunpack.c.l.b16 %v1601
    %v2049 = vunpack.c.h.b16 %v1601
    %v2050 = vunpack.c.l.b16 %v1602
    %v2051 = vunpack.c.h.b16 %v1602
    %v2052 = vunpack.c.l.b16 %v1603
    %v2053 = vunpack.c.h.b16 %v1603
    %v2054 = vunpack.c.l.b16 %v1604
    %v2055 = vunpack.c.h.b16 %v1604
    %v2056 = vunpack.c.l.b16 %v1605
    %v2057 = vunpack.c.h.b16 %v1605
    %v2058 = vunpack.c.l.b16 %v1606
    %v2059 = vunpack.c.h.b16 %v1606
    %v2060 = vunpack.c.l.b16 %v1607
    %v2061 = vunpack.c.h.b16 %v1607
    %v2062 = vunpack.c.l.b16 %v1608
    %v2063 = vunpack.c.h.b16 %v1608
    %v2064 = vunpack.c.l.b16 %v1609
    %v2065 = vunpack.c.h.b16 %v1609
    %v2066 = vunpack.c.l.b16 %v1610
    %v2067 = vunpack.c.h.b16 %v1610
    %v2068 = vunpack.c.l.b16 %v1611
    %v2069 = vunpack.c.h.b16 %v1611
    %v2070 = vunpack.c.l.b16 %v1612
    %v2071 = vunpack.c.h.b16 %v1612
    %v2072 = vunpack.c.l.b16 %v1613
    %v2073 = vunpack.c.h.b16 %v1613
    %v2074 = vunpack.c.l.b16 %v1614
    %v2075 = vunpack.c.h.b16 %v1614
    %v2076 = vunpack.c.l.b16 %v1615
    %v2077 = vunpack.c.h.b16 %v1615
    %v2078 = vunpack.c.l.b16 %v1616
    %v2079 = vunpack.c.h.b16 %v1616
    %v2080 = vunpack.c.l.b16 %v1617
    %v2081 = vunpack.c.h.b16 %v1617
    %v2082 = vunpack.c.l.b16 %v1618
    %v2083 = vunpack.c.h.b16 %v1618
    %v2084 = vunpack.c.l.b16 %v1619
    %v2085 = vunpack.c.h.b16 %v1619
    %v2086 = vunpack.c.l.b16 %v1620
    %v2087 = vunpack.c.h.b16 %v1620
    %v2088 = vunpack.c.l.b16 %v1621
    %v2089 = vunpack.c.h.b16 %v1621
    %v2090 = vunpack.c.l.b16 %v1622
    %v2091 = vunpack.c.h.b16 %v1622
    %v2092 = vunpack.c.l.b16 %v1623
    %v2093 = vunpack.c.h.b16 %v1623
    %v2094 = vunpack.c.l.b16 %v1624
    %v2095 = vunpack.c.h.b16 %v1624
    %v2096 = vunpack.c.l.b16 %v1625
    %v2097 = vunpack.c.h.b16 %v1625
    %v2098 = vunpack.c.l.b16 %v1626
    %v2099 = vunpack.c.h.b16 %v1626
    %v2100 = vunpack.c.l.b16 %v1627
    %v2101 = vunpack.c.h.b16 %v1627
    %v2102 = vunpack.c.l.b16 %v1628
    %v2103 = vunpack.c.h.b16 %v1628
    %v2104 = vunpack.c.l.b16 %v1629
    %v2105 = vunpack.c.h.b16 %v1629
    %v2106 = vunpack.c.l.b16 %v1630
    %v2107 = vunpack.c.h.b16 %v1630
    %v2108 = vunpack.c.l.b16 %v1631
    %v2109 = vunpack.c.h.b16 %v1631
    %v2110 = vunpack.c.l.b16 %v1632
    %v2111 = vunpack.c.h.b16 %v1632
    %v2112 = vunpack.c.l.b16 %v1633
    %v2113 = vunpack.c.h.b16 %v1633
    %v2114 = vunpack.c.l.b16 %v1634
    %v2115 = vunpack.c.h.b16 %v1634
    %v2116 = vunpack.c.l.b16 %v1635
    %v2117 = vunpack.c.h.b16 %v1635
    %v2118 = vunpack.c.l.b16 %v1636
    %v2119 = vunpack.c.h.b16 %v1636
    %v2120 = vunpack.c.l.b16 %v1637
    %v2121 = vunpack.c.h.b16 %v1637
    %v2122 = vunpack.c.l.b16 %v1638
    %v2123 = vunpack.c.h.b16 %v1638
    %v2124 = vunpack.c.l.b16 %v1639
    %v2125 = vunpack.c.h.b16 %v1639
    %v2126 = vunpack.c.l.b16 %v1640
    %v2127 = vunpack.c.h.b16 %v1640
    %v2128 = vunpack.c.l.b16 %v1641
    %v2129 = vunpack.c.h.b16 %v1641
    %v2130 = vunpack.c.l.b16 %v1642
    %v2131 = vunpack.c.h.b16 %v1642
    %v2132 = vunpack.c.l.b16 %v1643
    %v2133 = vunpack.c.h.b16 %v1643
    %v2134 = vunpack.c.l.b16 %v1644
    %v2135 = vunpack.c.h.b16 %v1644
    %v2136 = vunpack.c.l.b16 %v1645
    %v2137 = vunpack.c.h.b16 %v1645
    %v2138 = vunpack.c.l.b16 %v1646
    %v2139 = vunpack.c.h.b16 %v1646
    %v2140 = vunpack.c.l.b16 %v1647
    %v2141 = vunpack.c.h.b16 %v1647
    %v2142 = vunpack.c.l.b16 %v1648
    %v2143 = vunpack.c.h.b16 %v1648
    %v2144 = vunpack.c.l.b16 %v1649
    %v2145 = vunpack.c.h.b16 %v1649
    %v2146 = vunpack.c.l.b16 %v1650
    %v2147 = vunpack.c.h.b16 %v1650
    %v2148 = vunpack.c.l.b16 %v1651
    %v2149 = vunpack.c.h.b16 %v1651
    %v2150 = vunpack.c.l.b16 %v1652
    %v2151 = vunpack.c.h.b16 %v1652
    %v2152 = vunpack.c.l.b16 %v1653
    %v2153 = vunpack.c.h.b16 %v1653
    %v2154 = vunpack.c.l.b16 %v1654
    %v2155 = vunpack.c.h.b16 %v1654
    %v2156 = vunpack.c.l.b16 %v1655
    %v2157 = vunpack.c.h.b16 %v1655
    %v2158 = vunpack.c.l.b16 %v1656
    %v2159 = vunpack.c.h.b16 %v1656
    %v2160 = vunpack.c.l.b16 %v1657
    %v2161 = vunpack.c.h.b16 %v1657
    %v2162 = vunpack.c.l.b16 %v1658
    %v2163 = vunpack.c.h.b16 %v1658
    %v2164 = vunpack.c.l.b16 %v1659
    %v2165 = vunpack.c.h.b16 %v1659
    %v2166 = vunpack.c.l.b16 %v1660
    %v2167 = vunpack.c.h.b16 %v1660
    %v2168 = vunpack.c.l.b16 %v1661
    %v2169 = vunpack.c.h.b16 %v1661
    %v2170 = vunpack.c.l.b16 %v1662
    %v2171 = vunpack.c.h.b16 %v1662
    %v2172 = vunpack.c.l.b16 %v1663
    %v2173 = vunpack.c.h.b16 %v1663
    %v2174 = vunpack.c.l.b16 %v1664
    %v2175 = vunpack.c.h.b16 %v1664
    %v2176 = vunpack.c.l.b16 %v1665
    %v2177 = vunpack.c.h.b16 %v1665
    %v2178 = vunpack.c.l.b16 %v1666
    %v2179 = vunpack.c.h.b16 %v1666
    %v2180 = vunpack.c.l.b16 %v1667
    %v2181 = vunpack.c.h.b16 %v1667
    %v2182 = vunpack.c.l.b16 %v1668
    %v2183 = vunpack.c.h.b16 %v1668
    %v2184 = vunpack.c.l.b16 %v1669
    %v2185 = vunpack.c.h.b16 %v1669
    %v2186 = vunpack.c.l.b16 %v1670
    %v2187 = vunpack.c.h.b16 %v1670
    %v2188 = vunpack.c.l.b16 %v1671
    %v2189 = vunpack.c.h.b16 %v1671
    %v2190 = vunpack.c.l.b16 %v1672
    %v2191 = vunpack.c.h.b16 %v1672
    %v2192 = vunpack.c.l.b16 %v1673
    %v2193 = vunpack.c.h.b16 %v1673
    %v2194 = vunpack.c.l.b16 %v1674
    %v2195 = vunpack.c.h.b16 %v1674
    %v2196 = vunpack.c.l.b16 %v1675
    %v2197 = vunpack.c.h.b16 %v1675
    %v2198 = vunpack.c.l.b16 %v1676
    %v2199 = vunpack.c.h.b16 %v1676
    %v2200 = vunpack.c.l.b16 %v1677
    %v2201 = vunpack.c.h.b16 %v1677
    %v2202 = vunpack.c.l.b16 %v1678
    %v2203 = vunpack.c.h.b16 %v1678
    %v2204 = vunpack.c.l.b16 %v1679
    %v2205 = vunpack.c.h.b16 %v1679
    %v2206 = vunpack.c.l.b16 %v1680
    %v2207 = vunpack.c.h.b16 %v1680
    %v2208 = vunpack.c.l.b16 %v1681
    %v2209 = vunpack.c.h.b16 %v1681
    %v2210 = vunpack.c.l.b16 %v1682
    %v2211 = vunpack.c.h.b16 %v1682
    %v2212 = vunpack.c.l.b16 %v1683
    %v2213 = vunpack.c.h.b16 %v1683
    %v2214 = vunpack.c.l.b16 %v1684
    %v2215 = vunpack.c.h.b16 %v1684
    %v2216 = vunpack.c.l.b16 %v1685
    %v2217 = vunpack.c.h.b16 %v1685
    %v2218 = vunpack.c.l.b16 %v1686
    %v2219 = vunpack.c.h.b16 %v1686
    %v2220 = vunpack.c.l.b16 %v1687
    %v2221 = vunpack.c.h.b16 %v1687
    %v2222 = vunpack.c.l.b16 %v1688
    %v2223 = vunpack.c.h.b16 %v1688
    %v2224 = vunpack.c.l.b16 %v1689
    %v2225 = vunpack.c.h.b16 %v1689
    %v2226 = vunpack.c.l.b16 %v1690
    %v2227 = vunpack.c.h.b16 %v1690
    %v2228 = vunpack.c.l.b16 %v1691
    %v2229 = vunpack.c.h.b16 %v1691
    %v2230 = vunpack.c.l.b16 %v1692
    %v2231 = vunpack.c.h.b16 %v1692
    %v2232 = vunpack.c.l.b16 %v1693
    %v2233 = vunpack.c.h.b16 %v1693
    %v2234 = vunpack.c.l.b16 %v1694
    %v2235 = vunpack.c.h.b16 %v1694
    %v2236 = vunpack.c.l.b16 %v1695
    %v2237 = vunpack.c.h.b16 %v1695
    %v2238 = vunpack.c.l.b16 %v1696
    %v2239 = vunpack.c.h.b16 %v1696
    %v2240 = vunpack.c.l.b16 %v1697
    %v2241 = vunpack.c.h.b16 %v1697
    %v2242 = vunpack.c.l.b16 %v1698
    %v2243 = vunpack.c.h.b16 %v1698
    %v2244 = vunpack.c.l.b16 %v1699
    %v2245 = vunpack.c.h.b16 %v1699
    %v2246 = vunpack.c.l.b16 %v1700
    %v2247 = vunpack.c.h.b16 %v1700
    %v2248 = vunpack.c.l.b16 %v1701
    %v2249 = vunpack.c.h.b16 %v1701
    %v2250 = vunpack.c.l.b16 %v1702
    %v2251 = vunpack.c.h.b16 %v1702
    %v2252 = vunpack.c.l.b16 %v1703
    %v2253 = vunpack.c.h.b16 %v1703
    %v2254 = vunpack.c.l.b16 %v1704
    %v2255 = vunpack.c.h.b16 %v1704
    %v2256 = vunpack.c.l.b16 %v1705
    %v2257 = vunpack.c.h.b16 %v1705
    %v2258 = vunpack.c.l.b16 %v1706
    %v2259 = vunpack.c.h.b16 %v1706
    %v2260 = vunpack.c.l.b16 %v1707
    %v2261 = vunpack.c.h.b16 %v1707
    %v2262 = vunpack.c.l.b16 %v1708
    %v2263 = vunpack.c.h.b16 %v1708
    %v2264 = vunpack.c.l.b16 %v1709
    %v2265 = vunpack.c.h.b16 %v1709
    %v2266 = vunpack.c.l.b16 %v1710
    %v2267 = vunpack.c.h.b16 %v1710
    %v2268 = vunpack.c.l.b16 %v1711
    %v2269 = vunpack.c.h.b16 %v1711
    %v2270 = vunpack.c.l.b16 %v1712
    %v2271 = vunpack.c.h.b16 %v1712
    %v2272 = vunpack.c.l.b16 %v1713
    %v2273 = vunpack.c.h.b16 %v1713
    %v2274 = vunpack.c.l.b16 %v1714
    %v2275 = vunpack.c.h.b16 %v1714
    %v2276 = vunpack.c.l.b16 %v1715
    %v2277 = vunpack.c.h.b16 %v1715
    %v2278 = vunpack.c.l.b16 %v1716
    %v2279 = vunpack.c.h.b16 %v1716
    %v2280 = vunpack.c.l.b16 %v1717
    %v2281 = vunpack.c.h.b16 %v1717
    %v2282 = vunpack.c.l.b16 %v1718
    %v2283 = vunpack.c.h.b16 %v1718
    %v2284 = vunpack.c.l.b16 %v1719
    %v2285 = vunpack.c.h.b16 %v1719
    %v2286 = vunpack.c.l.b16 %v1720
    %v2287 = vunpack.c.h.b16 %v1720
    %v2288 = vunpack.c.l.b16 %v1721
    %v2289 = vunpack.c.h.b16 %v1721
    %v2290 = vunpack.c.l.b16 %v1722
    %v2291 = vunpack.c.h.b16 %v1722
    %v2292 = vunpack.c.l.b16 %v1723
    %v2293 = vunpack.c.h.b16 %v1723
    %v2294 = vunpack.c.l.b16 %v1724
    %v2295 = vunpack.c.h.b16 %v1724
    %v2296 = vunpack.c.l.b16 %v1725
    %v2297 = vunpack.c.h.b16 %v1725
    %v2298 = vunpack.c.l.b16 %v1726
    %v2299 = vunpack.c.h.b16 %v1726
    %v2300 = vunpack.c.l.b16 %v1727
    %v2301 = vunpack.c.h.b16 %v1727
    %v2302 = vunpack.c.l.b16 %v1728
    %v2303 = vunpack.c.h.b16 %v1728
    %v2304 = vunpack.c.l.b16 %v1729
    %v2305 = vunpack.c.h.b16 %v1729
    %v2306 = vunpack.c.l.b16 %v1730
    %v2307 = vunpack.c.h.b16 %v1730
    %v2308 = vunpack.c.l.b16 %v1731
    %v2309 = vunpack.c.h.b16 %v1731
    %v2310 = vunpack.c.l.b16 %v1732
    %v2311 = vunpack.c.h.b16 %v1732
    %v2312 = vunpack.c.l.b16 %v1733
    %v2313 = vunpack.c.h.b16 %v1733
    %v2314 = vpack.c.b16 %v1936, %v1930
    %v2315 = vpack.c.b16 %v1937, %v1931
    %v2316 = vpack.c.b16 %v1938, %v1932
    %v2317 = vpack.c.b16 %v1939, %v1933
    %v2318 = vpack.c.b16 %v1940, %v1934
    %v2319 = vpack.c.b16 %v1941, %v1935
    %v2320 = vpack.c.b16 %v1948, %v1942
    %v2321 = vpack.c.b16 %v1949, %v1943
    %v2322 = vpack.c.b16 %v1950, %v1944
    %v2323 = vpack.c.b16 %v1951, %v1945
    %v2324 = vpack.c.b16 %v1952, %v1946
    %v2325 = vpack.c.b16 %v1953, %v1947
    %v2326 = vpack.c.b16 %v1960, %v1954
    %v2327 = vpack.c.b16 %v1961, %v1955
    %v2328 = vpack.c.b16 %v1962, %v1956
    %v2329 = vpack.c.b16 %v1963, %v1957
    %v2330 = vpack.c.b16 %v1964, %v1958
    %v2331 = vpack.c.b16 %v1965, %v1959
    %v2332 = vpack.c.b16 %v1972, %v1966
    %v2333 = vpack.c.b16 %v1973, %v1967
    %v2334 = vpack.c.b16 %v1974, %v1968
    %v2335 = vpack.c.b16 %v1975, %v1969
    %v2336 = vpack.c.b16 %v1976, %v1970
    %v2337 = vpack.c.b16 %v1977, %v1971
    %v2338 = vpack.c.b16 %v1984, %v1978
    %v2339 = vpack.c.b16 %v1985, %v1979
    %v2340 = vpack.c.b16 %v1986, %v1980
    %v2341 = vpack.c.b16 %v1987, %v1981
    %v2342 = vpack.c.b16 %v1988, %v1982
    %v2343 = vpack.c.b16 %v1989, %v1983
    %v2344 = vpack.c.b16 %v1996, %v1990
    %v2345 = vpack.c.b16 %v1997, %v1991
    %v2346 = vpack.c.b16 %v1998, %v1992
    %v2347 = vpack.c.b16 %v1999, %v1993
    %v2348 = vpack.c.b16 %v2000, %v1994
    %v2349 = vpack.c.b16 %v2001, %v1995
    %v2350 = vpack.c.b16 %v2008, %v2002
    %v2351 = vpack.c.b16 %v2009, %v2003
    %v2352 = vpack.c.b16 %v2010, %v2004
    %v2353 = vpack.c.b16 %v2011, %v2005
    %v2354 = vpack.c.b16 %v2012, %v2006
    %v2355 = vpack.c.b16 %v2013, %v2007
    %v2356 = vpack.c.b16 %v2020, %v2014
    %v2357 = vpack.c.b16 %v2021, %v2015
    %v2358 = vpack.c.b16 %v2022, %v2016
    %v2359 = vpack.c.b16 %v2023, %v2017
    %v2360 = vpack.c.b16 %v2024, %v2018
    %v2361 = vpack.c.b16 %v2025, %v2019
    %v2362 = vpack.c.b16 %v2032, %v2026
    %v2363 = vpack.c.b16 %v2033, %v2027
    %v2364 = vpack.c.b16 %v2034, %v2028
    %v2365 = vpack.c.b16 %v2035, %v2029
    %v2366 = vpack.c.b16 %v2036, %v2030
    %v2367 = vpack.c.b16 %v2037, %v2031
    %v2368 = vpack.c.b16 %v2044, %v2038
    %v2369 = vpack.c.b16 %v2045, %v2039
    %v2370 = vpack.c.b16 %v2046, %v2040
    %v2371 = vpack.c.b16 %v2047, %v2041
    %v2372 = vpack.c.b16 %v2048, %v2042
    %v2373 = vpack.c.b16 %v2049, %v2043
    %v2374 = vpack.c.b16 %v2056, %v2050
    %v2375 = vpack.c.b16 %v2057, %v2051
    %v2376 = vpack.c.b16 %v2058, %v2052
    %v2377 = vpack.c.b16 %v2059, %v2053
    %v2378 = vpack.c.b16 %v2060, %v2054
    %v2379 = vpack.c.b16 %v2061, %v2055
    %v2380 = vpack.c.b16 %v2068, %v2062
    %v2381 = vpack.c.b16 %v2069, %v2063
    %v2382 = vpack.c.b16 %v2070, %v2064
    %v2383 = vpack.c.b16 %v2071, %v2065
    %v2384 = vpack.c.b16 %v2072, %v2066
    %v2385 = vpack.c.b16 %v2073, %v2067
    %v2386 = vpack.c.b16 %v2080, %v2074
    %v2387 = vpack.c.b16 %v2081, %v2075
    %v2388 = vpack.c.b16 %v2082, %v2076
    %v2389 = vpack.c.b16 %v2083, %v2077
    %v2390 = vpack.c.b16 %v2084, %v2078
    %v2391 = vpack.c.b16 %v2085, %v2079
    %v2392 = vpack.c.b16 %v2092, %v2086
    %v2393 = vpack.c.b16 %v2093, %v2087
    %v2394 = vpack.c.b16 %v2094, %v2088
    %v2395 = vpack.c.b16 %v2095, %v2089
    %v2396 = vpack.c.b16 %v2096, %v2090
    %v2397 = vpack.c.b16 %v2097, %v2091
    %v2398 = vpack.c.b16 %v2104, %v2098
    %v2399 = vpack.c.b16 %v2105, %v2099
    %v2400 = vpack.c.b16 %v2106, %v2100
    %v2401 = vpack.c.b16 %v2107, %v2101
    %v2402 = vpack.c.b16 %v2108, %v2102
    %v2403 = vpack.c.b16 %v2109, %v2103
    %v2404 = vpack.c.b16 %v2116, %v2110
    %v2405 = vpack.c.b16 %v2117, %v2111
    %v2406 = vpack.c.b16 %v2118, %v2112
    %v2407 = vpack.c.b16 %v2119, %v2113
    %v2408 = vpack.c.b16 %v2120, %v2114
    %v2409 = vpack.c.b16 %v2121, %v2115
    %v2410 = vpack.c.b16 %v2128, %v2122
    %v2411 = vpack.c.b16 %v2129, %v2123
    %v2412 = vpack.c.b16 %v2130, %v2124
    %v2413 = vpack.c.b16 %v2131, %v2125
    %v2414 = vpack.c.b16 %v2132, %v2126
    %v2415 = vpack.c.b16 %v2133, %v2127
    %v2416 = vpack.c.b16 %v2140, %v2134
    %v2417 = vpack.c.b16 %v2141, %v2135
    %v2418 = vpack.c.b16 %v2142, %v2136
    %v2419 = vpack.c.b16 %v2143, %v2137
    %v2420 = vpack.c.b16 %v2144, %v2138
    %v2421 = vpack.c.b16 %v2145, %v2139
    %v2422 = vpack.c.b16 %v2152, %v2146
    %v2423 = vpack.c.b16 %v2153, %v2147
    %v2424 = vpack.c.b16 %v2154, %v2148
    %v2425 = vpack.c.b16 %v2155, %v2149
    %v2426 = vpack.c.b16 %v2156, %v2150
    %v2427 = vpack.c.b16 %v2157, %v2151
    %v2428 = vpack.c.b16 %v2164, %v2158
    %v2429 = vpack.c.b16 %v2165, %v2159
    %v2430 = vpack.c.b16 %v2166, %v2160
    %v2431 = vpack.c.b16 %v2167, %v2161
    %v2432 = vpack.c.b16 %v2168, %v2162
    %v2433 = vpack.c.b16 %v2169, %v2163
    %v2434 = vpack.c.b16 %v2176, %v2170
    %v2435 = vpack.c.b16 %v2177, %v2171
    %v2436 = vpack.c.b16 %v2178, %v2172
    %v2437 = vpack.c.b16 %v2179, %v2173
    %v2438 = vpack.c.b16 %v2180, %v2174
    %v2439 = vpack.c.b16 %v2181, %v2175
    %v2440 = vpack.c.b16 %v2188, %v2182
    %v2441 = vpack.c.b16 %v2189, %v2183
    %v2442 = vpack.c.b16 %v2190, %v2184
    %v2443 = vpack.c.b16 %v2191, %v2185
    %v2444 = vpack.c.b16 %v2192, %v2186
    %v2445 = vpack.c.b16 %v2193, %v2187
    %v2446 = vpack.c.b16 %v2200, %v2194
    %v2447 = vpack.c.b16 %v2201, %v2195
    %v2448 = vpack.c.b16 %v2202, %v2196
    %v2449 = vpack.c.b16 %v2203, %v2197
    %v2450 = vpack.c.b16 %v2204, %v2198
    %v2451 = vpack.c.b16 %v2205, %v2199
    %v2452 = vpack.c.b16 %v2212, %v2206
    %v2453 = vpack.c.b16 %v2213, %v2207
    %v2454 = vpack.c.b16 %v2214, %v2208
    %v2455 = vpack.c.b16 %v2215, %v2209
    %v2456 = vpack.c.b16 %v2216, %v2210
    %v2457 = vpack.c.b16 %v2217, %v2211
    %v2458 = vpack.c.b16 %v2224, %v2218
    %v2459 = vpack.c.b16 %v2225, %v2219
    %v2460 = vpack.c.b16 %v2226, %v2220
    %v2461 = vpack.c.b16 %v2227, %v2221
    %v2462 = vpack.c.b16 %v2228, %v2222
    %v2463 = vpack.c.b16 %v2229, %v2223
    %v2464 = vpack.c.b16 %v2236, %v2230
    %v2465 = vpack.c.b16 %v2237, %v2231
    %v2466 = vpack.c.b16 %v2238, %v2232
    %v2467 = vpack.c.b16 %v2239, %v2233
    %v2468 = vpack.c.b16 %v2240, %v2234
    %v2469 = vpack.c.b16 %v2241, %v2235
    %v2470 = vpack.c.b16 %v2248, %v2242
    %v2471 = vpack.c.b16 %v2249, %v2243
    %v2472 = vpack.c.b16 %v2250, %v2244
    %v2473 = vpack.c.b16 %v2251, %v2245
    %v2474 = vpack.c.b16 %v2252, %v2246
    %v2475 = vpack.c.b16 %v2253, %v2247
    %v2476 = vpack.c.b16 %v2260, %v2254
    %v2477 = vpack.c.b16 %v2261, %v2255
    %v2478 = vpack.c.b16 %v2262, %v2256
    %v2479 = vpack.c.b16 %v2263, %v2257
    %v2480 = vpack.c.b16 %v2264, %v2258
    %v2481 = vpack.c.b16 %v2265, %v2259
    %v2482 = vpack.c.b16 %v2272, %v2266
    %v2483 = vpack.c.b16 %v2273, %v2267
    %v2484 = vpack.c.b16 %v2274, %v2268
    %v2485 = vpack.c.b16 %v2275, %v2269
    %v2486 = vpack.c.b16 %v2276, %v2270
    %v2487 = vpack.c.b16 %v2277, %v2271
    %v2488 = vpack.c.b16 %v2284, %v2278
    %v2489 = vpack.c.b16 %v2285, %v2279
    %v2490 = vpack.c.b16 %v2286, %v2280
    %v2491 = vpack.c.b16 %v2287, %v2281
    %v2492 = vpack.c.b16 %v2288, %v2282
    %v2493 = vpack.c.b16 %v2289, %v2283
    %v2494 = vpack.c.b16 %v2296, %v2290
    %v2495 = vpack.c.b16 %v2297, %v2291
    %v2496 = vpack.c.b16 %v2298, %v2292
    %v2497 = vpack.c.b16 %v2299, %v2293
    %v2498 = vpack.c.b16 %v2300, %v2294
    %v2499 = vpack.c.b16 %v2301, %v2295
    %v2500 = vpack.c.b16 %v2308, %v2302
    %v2501 = vpack.c.b16 %v2309, %v2303
    %v2502 = vpack.c.b16 %v2310, %v2304
    %v2503 = vpack.c.b16 %v2311, %v2305
    %v2504 = vpack.c.b16 %v2312, %v2306
    %v2505 = vpack.c.b16 %v2313, %v2307
    %2698 = vmatprep.subr.bf16.mxu0 %v2315
    %2699 = vmatpush1.bf16.msra.mxu0 %v2314
    %2700 = vmatprep.subr.bf16.mxu0 %v2321
    %2701 = vmatpush1.bf16.msra.mxu0 %v2320
    %2702 = vmatprep.subr.bf16.mxu0 %v2327
    %2703 = vmatpush1.bf16.msra.mxu0 %v2326
    %2704 = vmatprep.subr.bf16.mxu0 %v2333
    %2705 = vmatpush1.bf16.msra.mxu0 %v2332
    %2706 = vmatprep.subr.bf16.mxu0 %v2339
    %2707 = vmatpush1.bf16.msra.mxu0 %v2338
    %2708 = vmatprep.subr.bf16.mxu0 %v2345
    %2709 = vmatpush1.bf16.msra.mxu0 %v2344
    %2710 = vmatprep.subr.bf16.mxu0 %v2351
    %2711 = vmatpush1.bf16.msra.mxu0 %v2350
    %2712 = vmatprep.subr.bf16.mxu0 %v2357
    %2713 = vmatpush1.bf16.msra.mxu0 %v2356
    %2714 = vmatprep.subr.bf16.mxu0 %v2363
    %2715 = vmatpush1.bf16.msra.mxu0 %v2362
    %2716 = vmatprep.subr.bf16.mxu0 %v2369
    %2717 = vmatpush1.bf16.msra.mxu0 %v2368
    %2718 = vmatprep.subr.bf16.mxu0 %v2375
    %2719 = vmatpush1.bf16.msra.mxu0 %v2374
    %2720 = vmatprep.subr.bf16.mxu0 %v2381
    %2721 = vmatpush1.bf16.msra.mxu0 %v2380
    %2722 = vmatprep.subr.bf16.mxu0 %v2387
    %2723 = vmatpush1.bf16.msra.mxu0 %v2386
    %2724 = vmatprep.subr.bf16.mxu0 %v2393
    %2725 = vmatpush1.bf16.msra.mxu0 %v2392
    %2726 = vmatprep.subr.bf16.mxu0 %v2399
    %2727 = vmatpush1.bf16.msra.mxu0 %v2398
    %2728 = vmatprep.subr.bf16.mxu0 %v2405
    %2729 = vmatpush1.bf16.msra.mxu0 %v2404
    %2730 = vmatprep.mubr.bf16.mxu0 %v1735
    %2731 = vmatmul.mubr.bf16.gmra.mrb[0].mxu0 %v1734
    %v2732 = vpop.f32.mrb[0].mxu0
    %v2733 = vadd.f32 0.0, %v2732
    %v2734 = vpop.f32.mrb[0].mxu0
    %v2735 = vadd.f32 0.0, %v2734
    %v2736 = vpop.f32.mrb[0].mxu0
    %v2737 = vadd.f32 0.0, %v2736
    %v2738 = vpop.f32.mrb[0].mxu0
    %v2739 = vadd.f32 0.0, %v2738
    %2740 = vdwg.mxu0
    %2741 = vmatprep.subr.bf16.mxu0 %v2411
    %2742 = vmatpush1.bf16.msra.mxu0 %v2410
    %2743 = vmatprep.subr.bf16.mxu0 %v2417
    %2744 = vmatpush1.bf16.msra.mxu0 %v2416
    %2745 = vmatprep.subr.bf16.mxu0 %v2423
    %2746 = vmatpush1.bf16.msra.mxu0 %v2422
    %2747 = vmatprep.subr.bf16.mxu0 %v2429
    %2748 = vmatpush1.bf16.msra.mxu0 %v2428
    %2749 = vmatprep.subr.bf16.mxu0 %v2435
    %2750 = vmatpush1.bf16.msra.mxu0 %v2434
    %2751 = vmatprep.subr.bf16.mxu0 %v2441
    %2752 = vmatpush1.bf16.msra.mxu0 %v2440
    %2753 = vmatprep.subr.bf16.mxu0 %v2447
    %2754 = vmatpush1.bf16.msra.mxu0 %v2446
    %2755 = vmatprep.subr.bf16.mxu0 %v2453
    %2756 = vmatpush1.bf16.msra.mxu0 %v2452
    %2757 = vmatprep.subr.bf16.mxu0 %v2459
    %2758 = vmatpush1.bf16.msra.mxu0 %v2458
    %2759 = vmatprep.subr.bf16.mxu0 %v2465
    %2760 = vmatpush1.bf16.msra.mxu0 %v2464
    %2761 = vmatprep.subr.bf16.mxu0 %v2471
    %2762 = vmatpush1.bf16.msra.mxu0 %v2470
    %2763 = vmatprep.subr.bf16.mxu0 %v2477
    %2764 = vmatpush1.bf16.msra.mxu0 %v2476
    %2765 = vmatprep.subr.bf16.mxu0 %v2483
    %2766 = vmatpush1.bf16.msra.mxu0 %v2482
    %2767 = vmatprep.subr.bf16.mxu0 %v2489
    %2768 = vmatpush1.bf16.msra.mxu0 %v2488
    %2769 = vmatprep.subr.bf16.mxu0 %v2495
    %2770 = vmatpush1.bf16.msra.mxu0 %v2494
    %2771 = vmatprep.subr.bf16.mxu0 %v2501
    %2772 = vmatpush1.bf16.msra.mxu0 %v2500
    %2773 = vmatprep.mubr.bf16.mxu0 %v1737
    %2774 = vmatmul.mubr.bf16.gmra.mrb[0].mxu0 %v1736
    %v2775 = vpop.f32.mrb[0].mxu0
    %v2776 = vadd.f32 %v2733, %v2775
    %v2777 = vpop.f32.mrb[0].mxu0
    %v2778 = vadd.f32 %v2735, %v2777
    %v2779 = vpop.f32.mrb[0].mxu0
    %v2780 = vadd.f32 %v2737, %v2779
    %v2781 = vpop.f32.mrb[0].mxu0
    %v2782 = vadd.f32 %v2739, %v2781
    %2783 = vdwg.mxu0
    %2784 = vmatprep.subr.bf16.mxu0 %v2317
    %2785 = vmatpush1.bf16.msra.mxu0 %v2316
    %2786 = vmatprep.subr.bf16.mxu0 %v2323
    %2787 = vmatpush1.bf16.msra.mxu0 %v2322
    %2788 = vmatprep.subr.bf16.mxu0 %v2329
    %2789 = vmatpush1.bf16.msra.mxu0 %v2328
    %2790 = vmatprep.subr.bf16.mxu0 %v2335
    %2791 = vmatpush1.bf16.msra.mxu0 %v2334
    %2792 = vmatprep.subr.bf16.mxu0 %v2341
    %2793 = vmatpush1.bf16.msra.mxu0 %v2340
    %2794 = vmatprep.subr.bf16.mxu0 %v2347
    %2795 = vmatpush1.bf16.msra.mxu0 %v2346
    %2796 = vmatprep.subr.bf16.mxu0 %v2353
    %2797 = vmatpush1.bf16.msra.mxu0 %v2352
    %2798 = vmatprep.subr.bf16.mxu0 %v2359
    %2799 = vmatpush1.bf16.msra.mxu0 %v2358
    %2800 = vmatprep.subr.bf16.mxu0 %v2365
    %2801 = vmatpush1.bf16.msra.mxu0 %v2364
    %2802 = vmatprep.subr.bf16.mxu0 %v2371
    %2803 = vmatpush1.bf16.msra.mxu0 %v2370
    %2804 = vmatprep.subr.bf16.mxu0 %v2377
    %2805 = vmatpush1.bf16.msra.mxu0 %v2376
    %2806 = vmatprep.subr.bf16.mxu0 %v2383
    %2807 = vmatpush1.bf16.msra.mxu0 %v2382
    %2808 = vmatprep.subr.bf16.mxu0 %v2389
    %2809 = vmatpush1.bf16.msra.mxu0 %v2388
    %2810 = vmatprep.subr.bf16.mxu0 %v2395
    %2811 = vmatpush1.bf16.msra.mxu0 %v2394
    %2812 = vmatprep.subr.bf16.mxu0 %v2401
    %2813 = vmatpush1.bf16.msra.mxu0 %v2400
    %2814 = vmatprep.subr.bf16.mxu0 %v2407
    %2815 = vmatpush1.bf16.msra.mxu0 %v2406
    %2816 = vmatprep.mubr.bf16.mxu0 %v1735
    %2817 = vmatmul.mubr.bf16.gmra.mrb[0].mxu0 %v1734
    %v2818 = vpop.f32.mrb[0].mxu0
    %v2819 = vadd.f32 0.0, %v2818
    %v2820 = vpop.f32.mrb[0].mxu0
    %v2821 = vadd.f32 0.0, %v2820
    %v2822 = vpop.f32.mrb[0].mxu0
    %v2823 = vadd.f32 0.0, %v2822
    %v2824 = vpop.f32.mrb[0].mxu0
    %v2825 = vadd.f32 0.0, %v2824
    %2826 = vdwg.mxu0
    %2827 = vmatprep.subr.bf16.mxu0 %v2413
    %2828 = vmatpush1.bf16.msra.mxu0 %v2412
    %2829 = vmatprep.subr.bf16.mxu0 %v2419
    %2830 = vmatpush1.bf16.msra.mxu0 %v2418
    %2831 = vmatprep.subr.bf16.mxu0 %v2425
    %2832 = vmatpush1.bf16.msra.mxu0 %v2424
    %2833 = vmatprep.subr.bf16.mxu0 %v2431
    %2834 = vmatpush1.bf16.msra.mxu0 %v2430
    %2835 = vmatprep.subr.bf16.mxu0 %v2437
    %2836 = vmatpush1.bf16.msra.mxu0 %v2436
    %2837 = vmatprep.subr.bf16.mxu0 %v2443
    %2838 = vmatpush1.bf16.msra.mxu0 %v2442
    %2839 = vmatprep.subr.bf16.mxu0 %v2449
    %2840 = vmatpush1.bf16.msra.mxu0 %v2448
    %2841 = vmatprep.subr.bf16.mxu0 %v2455
    %2842 = vmatpush1.bf16.msra.mxu0 %v2454
    %2843 = vmatprep.subr.bf16.mxu0 %v2461
    %2844 = vmatpush1.bf16.msra.mxu0 %v2460
    %2845 = vmatprep.subr.bf16.mxu0 %v2467
    %2846 = vmatpush1.bf16.msra.mxu0 %v2466
    %2847 = vmatprep.subr.bf16.mxu0 %v2473
    %2848 = vmatpush1.bf16.msra.mxu0 %v2472
    %2849 = vmatprep.subr.bf16.mxu0 %v2479
    %2850 = vmatpush1.bf16.msra.mxu0 %v2478
    %2851 = vmatprep.subr.bf16.mxu0 %v2485
    %2852 = vmatpush1.bf16.msra.mxu0 %v2484
    %2853 = vmatprep.subr.bf16.mxu0 %v2491
    %2854 = vmatpush1.bf16.msra.mxu0 %v2490
    %2855 = vmatprep.subr.bf16.mxu0 %v2497
    %2856 = vmatpush1.bf16.msra.mxu0 %v2496
    %2857 = vmatprep.subr.bf16.mxu0 %v2503
    %2858 = vmatpush1.bf16.msra.mxu0 %v2502
    %2859 = vmatprep.mubr.bf16.mxu0 %v1737
    %2860 = vmatmul.mubr.bf16.gmra.mrb[0].mxu0 %v1736
    %v2861 = vpop.f32.mrb[0].mxu0
    %v2862 = vadd.f32 %v2819, %v2861
    %v2863 = vpop.f32.mrb[0].mxu0
    %v2864 = vadd.f32 %v2821, %v2863
    %v2865 = vpop.f32.mrb[0].mxu0
    %v2866 = vadd.f32 %v2823, %v2865
    %v2867 = vpop.f32.mrb[0].mxu0
    %v2868 = vadd.f32 %v2825, %v2867
    %2869 = vdwg.mxu0
    %2870 = vmatprep.subr.bf16.mxu0 %v2319
    %2871 = vmatpush1.bf16.msra.mxu0 %v2318
    %2872 = vmatprep.subr.bf16.mxu0 %v2325
    %2873 = vmatpush1.bf16.msra.mxu0 %v2324
    %2874 = vmatprep.subr.bf16.mxu0 %v2331
    %2875 = vmatpush1.bf16.msra.mxu0 %v2330
    %2876 = vmatprep.subr.bf16.mxu0 %v2337
    %2877 = vmatpush1.bf16.msra.mxu0 %v2336
    %2878 = vmatprep.subr.bf16.mxu0 %v2343
    %2879 = vmatpush1.bf16.msra.mxu0 %v2342
    %2880 = vmatprep.subr.bf16.mxu0 %v2349
    %2881 = vmatpush1.bf16.msra.mxu0 %v2348
    %2882 = vmatprep.subr.bf16.mxu0 %v2355
    %2883 = vmatpush1.bf16.msra.mxu0 %v2354
    %2884 = vmatprep.subr.bf16.mxu0 %v2361
    %2885 = vmatpush1.bf16.msra.mxu0 %v2360
    %2886 = vmatprep.subr.bf16.mxu0 %v2367
    %2887 = vmatpush1.bf16.msra.mxu0 %v2366
    %2888 = vmatprep.subr.bf16.mxu0 %v2373
    %2889 = vmatpush1.bf16.msra.mxu0 %v2372
    %2890 = vmatprep.subr.bf16.mxu0 %v2379
    %2891 = vmatpush1.bf16.msra.mxu0 %v2378
    %2892 = vmatprep.subr.bf16.mxu0 %v2385
    %2893 = vmatpush1.bf16.msra.mxu0 %v2384
    %2894 = vmatprep.subr.bf16.mxu0 %v2391
    %2895 = vmatpush1.bf16.msra.mxu0 %v2390
    %2896 = vmatprep.subr.bf16.mxu0 %v2397
    %2897 = vmatpush1.bf16.msra.mxu0 %v2396
    %2898 = vmatprep.subr.bf16.mxu0 %v2403
    %2899 = vmatpush1.bf16.msra.mxu0 %v2402
    %2900 = vmatprep.subr.bf16.mxu0 %v2409
    %2901 = vmatpush1.bf16.msra.mxu0 %v2408
    %2902 = vmatprep.mubr.bf16.mxu0 %v1735
    %2903 = vmatmul.mubr.bf16.gmra.mrb[0].mxu0 %v1734
    %v2904 = vpop.f32.mrb[0].mxu0
    %v2905 = vadd.f32 0.0, %v2904
    %v2906 = vpop.f32.mrb[0].mxu0
    %v2907 = vadd.f32 0.0, %v2906
    %v2908 = vpop.f32.mrb[0].mxu0
    %v2909 = vadd.f32 0.0, %v2908
    %v2910 = vpop.f32.mrb[0].mxu0
    %v2911 = vadd.f32 0.0, %v2910
    %2912 = vdwg.mxu0
    %2913 = vmatprep.subr.bf16.mxu0 %v2415
    %2914 = vmatpush1.bf16.msra.mxu0 %v2414
    %2915 = vmatprep.subr.bf16.mxu0 %v2421
    %2916 = vmatpush1.bf16.msra.mxu0 %v2420
    %2917 = vmatprep.subr.bf16.mxu0 %v2427
    %2918 = vmatpush1.bf16.msra.mxu0 %v2426
    %2919 = vmatprep.subr.bf16.mxu0 %v2433
    %2920 = vmatpush1.bf16.msra.mxu0 %v2432
    %2921 = vmatprep.subr.bf16.mxu0 %v2439
    %2922 = vmatpush1.bf16.msra.mxu0 %v2438
    %2923 = vmatprep.subr.bf16.mxu0 %v2445
    %2924 = vmatpush1.bf16.msra.mxu0 %v2444
    %2925 = vmatprep.subr.bf16.mxu0 %v2451
    %2926 = vmatpush1.bf16.msra.mxu0 %v2450
    %2927 = vmatprep.subr.bf16.mxu0 %v2457
    %2928 = vmatpush1.bf16.msra.mxu0 %v2456
    %2929 = vmatprep.subr.bf16.mxu0 %v2463
    %2930 = vmatpush1.bf16.msra.mxu0 %v2462
    %2931 = vmatprep.subr.bf16.mxu0 %v2469
    %2932 = vmatpush1.bf16.msra.mxu0 %v2468
    %2933 = vmatprep.subr.bf16.mxu0 %v2475
    %2934 = vmatpush1.bf16.msra.mxu0 %v2474
    %2935 = vmatprep.subr.bf16.mxu0 %v2481
    %2936 = vmatpush1.bf16.msra.mxu0 %v2480
    %2937 = vmatprep.subr.bf16.mxu0 %v2487
    %2938 = vmatpush1.bf16.msra.mxu0 %v2486
    %2939 = vmatprep.subr.bf16.mxu0 %v2493
    %2940 = vmatpush1.bf16.msra.mxu0 %v2492
    %2941 = vmatprep.subr.bf16.mxu0 %v2499
    %2942 = vmatpush1.bf16.msra.mxu0 %v2498
    %2943 = vmatprep.subr.bf16.mxu0 %v2505
    %2944 = vmatpush1.bf16.msra.mxu0 %v2504
    %2945 = vmatprep.mubr.bf16.mxu0 %v1737
    %2946 = vmatmul.mubr.bf16.gmra.mrb[0].mxu0 %v1736
    %v2947 = vpop.f32.mrb[0].mxu0
    %v2948 = vadd.f32 %v2905, %v2947
    %v2949 = vpop.f32.mrb[0].mxu0
    %v2950 = vadd.f32 %v2907, %v2949
    %v2951 = vpop.f32.mrb[0].mxu0
    %v2952 = vadd.f32 %v2909, %v2951
    %v2953 = vpop.f32.mrb[0].mxu0
    %v2954 = vadd.f32 %v2911, %v2953
    %2955 = vdwg.mxu0
    %v2956 = vtanh.pop %v2776
    %v2957 = vtanh.pop %v2778
    %v2958 = vtanh.pop %v2862
    %v2959 = vtanh.pop %v2864
    %v2960 = vtanh.pop %v2948
    %v2961 = vtanh.pop %v2950
    %v2962 = vtanh.pop %v2780
    %v2963 = vtanh.pop %v2782
    %v2964 = vtanh.pop %v2866
    %v2965 = vtanh.pop %v2868
    %v2966 = vtanh.pop %v2952
    %v2967 = vtanh.pop %v2954
    %2968 = vst [vmem:[#allocation7] sm:$0xff] %v2956
    %2969 = vst [vmem:[#allocation7 + $0x8] sm:$0xff] %v2957
    %2970 = vst [vmem:[#allocation7 + $0x10] sm:$0xff] %v2958
    %2971 = vst [vmem:[#allocation7 + $0x18] sm:$0xff] %v2959
    %2972 = vst [vmem:[#allocation7 + $0x20] sm:$0xff] %v2960
    %2973 = vst [vmem:[#allocation7 + $0x28] sm:$0xff] %v2961
    %2974 = vst [vmem:[#allocation7 + $0x30] sm:$0xff] %v2962
    %2975 = vst [vmem:[#allocation7 + $0x38] sm:$0xff] %v2963
    %2976 = vst [vmem:[#allocation7 + $0x40] sm:$0xff] %v2964
    %2977 = vst [vmem:[#allocation7 + $0x48] sm:$0xff] %v2965
    %2978 = vst [vmem:[#allocation7 + $0x50] sm:$0xff] %v2966
    %2979 = vst [vmem:[#allocation7 + $0x58] sm:$0xff] %v2967
    // Predicated region
    $region50: #{tpu_custom_call.1} parent=1 // pred_check
      _
    $region51: #{tpu_custom_call.1} parent=1 // pred_check_branch
      %2981 = sbr.rel (0) target = $region53
    $region52: #{tpu_custom_call.1} parent=1 // pred_region
      %s2983 = ssub.s32 1536, 1536
      %2984 = vsyncadd [#allocation4], %s2983
      %s2985 = sshll.u32 [#allocation7], 4
      %s2986 = int_to_ptr.vmem [resolvable:$true] %s2985
      %2991 = dma.vmem_to_hbm [thread:$0]  %s2986, 1536, %s10, [#allocation4], 768, 768, 48
    $region53: #{tpu_custom_call.1} parent=1 // pred_fallthru
      _
    // Predicated region
    $region54: #{tpu_custom_call.1} parent=1 // pred_check
      _
    $region55: #{tpu_custom_call.1} parent=1 // pred_check_branch
      %2993 = sbr.rel (0) target = $region57
    $region56: #{tpu_custom_call.1} parent=1 // pred_region
      %2994 = dma.done [#allocation4], 1536
    $region57: #{tpu_custom_call.1} parent=1 // pred_fallthru
      _
    %2995 = vsyncpa [#allocation3], 1
    %2996 = vsyncpa [#allocation6], 1
    %2997 = vsyncpa [#allocation4], 1

</llo_original>
